<compile_context>
chip_gen: v7x
topology: tpu7x:2x2x1
jax: 0.10.0
libtpu: 0.0.40
codegen_flags: <defaults>
</compile_context>

<pallas_src>
import functools

import jax
import jax.numpy as jnp
import numpy as np
from jax import lax
from jax.experimental import pallas as pl
from jax.experimental.pallas import tpu as pltpu

EPS = 1e-5


def _row_chunk(rows, width, target_m=256, max_m=1024):
    """Smallest divisor of `rows` whose chunk M = chunk*width reaches target_m
    (keeps the MXU M dim well fed), capped so chunk values stay VMEM-friendly."""
    chunk = rows
    for d in range(1, rows + 1):
        if rows % d == 0 and (d * width >= target_m or d == rows):
            chunk = d
            break
    if chunk * width > max_m:
        fitting = [d for d in range(1, rows + 1)
                   if rows % d == 0 and d * width <= max_m]
        chunk = max(fitting) if fitting else 1
    return chunk


def _hint_multiple(x, m):
    """pl.multiple_of on traced values; pass-through on Python ints."""
    if isinstance(x, (int, np.integer)):
        return x
    return pl.multiple_of(x, m)


# --------------------------------------------------------------------------- #
# Fused Bottleneck kernel
# --------------------------------------------------------------------------- #
def _bottleneck_kernel(x_ref, *rest, H, W, Cin, Cmid, Cexp, Ho, Wo,
                       stride, TR, THo, has_proj):
    # rest = ([xs_ref] if stride>1) + [w1, sb1, w2, sb2, w3, sb3]
    #        + ([ws, sbs] if has_proj) + [o_ref, xp_scr]
    i = 0
    xs_ref = None
    if stride > 1:
        xs_ref = rest[i]; i += 1
    w1_ref, sb1_ref, w2_ref, sb2_ref, w3_ref, sb3_ref = rest[i:i + 6]; i += 6
    if has_proj:
        ws_ref, sbs_ref = rest[i:i + 2]; i += 2
    o_ref, xp_scr = rest[i], rest[i + 1]

    cdt = xp_scr.dtype                       # compute dtype (f32 or bf16)

    # ---- zero only the 1-pixel border of the conv1 staging buffer ---------
    xp_scr[pl.ds(0, 1), :, :] = jnp.zeros((1, W + 2, Cmid), cdt)
    xp_scr[pl.ds(H + 1, 1), :, :] = jnp.zeros((1, W + 2, Cmid), cdt)
    xp_scr[:, pl.ds(0, 1), :] = jnp.zeros((H + 2, 1, Cmid), cdt)
    xp_scr[:, pl.ds(W + 1, 1), :] = jnp.zeros((H + 2, 1, Cmid), cdt)

    # ---- folded-BN scale/bias (kept f32; epilogues stay f32 on v5e too) ---
    s1, b1 = sb1_ref[0:1, :], sb1_ref[1:2, :]
    s2, b2 = sb2_ref[0:1, :], sb2_ref[1:2, :]
    s3, b3 = sb3_ref[0:1, :], sb3_ref[1:2, :]
    if has_proj:
        ss, bs = sbs_ref[0:1, :], sbs_ref[1:2, :]

    w1 = w1_ref[...]
    w3 = w3_ref[...]
    ws = ws_ref[...] if has_proj else None

    # ---- stage 1: conv1 (1x1) + BN1 + ReLU into the padded staging buffer -
    n1 = H // TR

    def conv1_chunk(r, carry):
        r0 = _hint_multiple(r * TR, TR)
        xc = x_ref[0, pl.ds(r0, TR), :, :].reshape(TR * W, Cin)
        y1 = jnp.dot(xc, w1, preferred_element_type=jnp.float32)
        y1 = jnp.maximum(y1 * s1 + b1, 0.0)
        xp_scr[pl.ds(r0 + 1, TR), pl.ds(1, W), :] = (
            y1.reshape(TR, W, Cmid).astype(cdt))
        return carry

    lax.fori_loop(0, n1, conv1_chunk, 0, unroll=(n1 <= 8))

    # ---- stage 2: conv2 (3x3, stride) + BN2 + ReLU, conv3 (1x1) + BN3,
    #      shortcut, residual add, ReLU -- per output-row chunk -------------
    n2 = Ho // THo
    M = THo * Wo

    def out_chunk(c, carry):
        co = _hint_multiple(c * THo, THo)

        acc = None                            # vreg/MRB accumulation, no RMW
        for dy in range(3):                   # 3 matmuls: dx taps merged (K=3*Cmid)
            if stride == 1:
                slab = xp_scr[pl.ds(co + dy, THo), :, :]          # (THo, W+2, Cmid)
                parts = [slab[:, dx:dx + Wo, :] for dx in range(3)]
            else:
                parts = [xp_scr[pl.ds(co * stride + dy, THo, stride),
                                pl.ds(dx, Wo, stride), :]
                         for dx in range(3)]
            patch = jnp.concatenate(parts, axis=-1).reshape(M, 3 * Cmid)
            part = jnp.dot(patch, w2_ref[dy], preferred_element_type=jnp.float32)
            acc = part if acc is None else acc + part

        y2 = jnp.maximum(acc * s2 + b2, 0.0).astype(cdt)          # (M, Cmid)

        t = jnp.dot(y2, w3, preferred_element_type=jnp.float32)
        t = t * s3 + b3                                           # (M, Cexp)

        src = x_ref if stride == 1 else xs_ref
        xsc = src[0, pl.ds(co, THo), :, :].reshape(M, Cin)
        if has_proj:
            r = jnp.dot(xsc, ws, preferred_element_type=jnp.float32)
            r = r * ss + bs
        else:
            r = xsc.astype(jnp.float32)       # identity: Cin == Cexp, stride == 1

        o_ref[0, pl.ds(co, THo), :, :] = (
            jnp.maximum(t + r, 0.0).reshape(THo, Wo, Cexp).astype(o_ref.dtype))
        return carry

    lax.fori_loop(0, n2, out_chunk, 0, unroll=(n2 <= 8))


def fused_bottleneck(x, fp, stride):
    """x: (N, H, W, Cin) NHWC in the compute dtype.  Returns (N, Ho, Wo, Cexp) f32."""
    N, H, W, Cin = x.shape
    Cmid = fp["w1"].shape[1]
    Cexp = fp["w3"].shape[1]
    has_proj = fp["has_proj"]
    assert H % stride == 0 and W % stride == 0
    Ho, Wo = H // stride, W // stride
    if not has_proj:
        assert stride == 1 and Cin == Cexp, "identity shortcut needs stride=1, Cin==Cexp"

    TR = _row_chunk(H, W)        # conv1 input-row chunk  (M = TR*W  >= 256 target)
    THo = _row_chunk(Ho, Wo)     # output-row chunk       (M = THo*Wo >= 256 target)

    args = [x]
    in_specs = [pl.BlockSpec((1, H, W, Cin), lambda n: (n, 0, 0, 0))]
    if stride > 1:
        # Pre-strided shortcut input: one cheap XLA slice pass instead of DMA-ing
        # the full x a second time and gathering it strided inside the kernel.
        xs = x[:, ::stride, ::stride, :]
        args.append(xs)
        in_specs.append(pl.BlockSpec((1, Ho, Wo, Cin), lambda n: (n, 0, 0, 0)))

    args += [fp["w1"], fp["sb1"], fp["w2"], fp["sb2"], fp["w3"], fp["sb3"]]
    in_specs += [
        pl.BlockSpec((Cin, Cmid), lambda n: (0, 0)),
        pl.BlockSpec((2, Cmid), lambda n: (0, 0)),
        pl.BlockSpec((3, 3 * Cmid, Cmid), lambda n: (0, 0, 0)),
        pl.BlockSpec((2, Cmid), lambda n: (0, 0)),
        pl.BlockSpec((Cmid, Cexp), lambda n: (0, 0)),
        pl.BlockSpec((2, Cexp), lambda n: (0, 0)),
    ]
    if has_proj:
        args += [fp["ws"], fp["sbs"]]
        in_specs += [pl.BlockSpec((Cin, Cexp), lambda n: (0, 0)),
                     pl.BlockSpec((2, Cexp), lambda n: (0, 0))]

    kern = functools.partial(
        _bottleneck_kernel, H=H, W=W, Cin=Cin, Cmid=Cmid, Cexp=Cexp,
        Ho=Ho, Wo=Wo, stride=stride, TR=TR, THo=THo, has_proj=has_proj)

    return pl.pallas_call(
        kern,
        out_shape=jax.ShapeDtypeStruct((N, Ho, Wo, Cexp), jnp.float32),
        grid=(N,),
        in_specs=in_specs,
        out_specs=pl.BlockSpec((1, Ho, Wo, Cexp), lambda n: (n, 0, 0, 0)),
        scratch_shapes=[pltpu.VMEM((H + 2, W + 2, Cmid), fp["w1"].dtype)],
        compiler_params=pltpu.CompilerParams(
            dimension_semantics=("parallel",),
            vmem_limit_bytes=48 * 1024 * 1024),
    )(*args)


# --------------------------------------------------------------------------- #
# Parameters (PyTorch OIHW convention), folding, forward, pure-JAX reference
# --------------------------------------------------------------------------- #
def init_params(key, in_channels, out_channels, stride, use_conv=False):
    expansion = 4
    cexp = out_channels * expansion
    ks = jax.random.split(key, 8)

    def bn_params(k, c):
        k1, k2, k3, k4 = jax.random.split(k, 4)
        return dict(gamma=1.0 + 0.1 * jax.random.normal(k1, (c,), jnp.float32),
                    beta=0.1 * jax.random.normal(k2, (c,), jnp.float32),
                    mean=0.1 * jax.random.normal(k3, (c,), jnp.float32),
                    var=1.0 + 0.1 * jnp.abs(jax.random.normal(k4, (c,), jnp.float32)))

    p = {
        "w1": 0.1 * jax.random.normal(ks[0], (out_channels, in_channels, 1, 1), jnp.float32),
        "w2": 0.1 * jax.random.normal(ks[1], (out_channels, out_channels, 3, 3), jnp.float32),
        "w3": 0.1 * jax.random.normal(ks[2], (cexp, out_channels, 1, 1), jnp.float32),
        "bn1": bn_params(ks[3], out_channels),
        "bn2": bn_params(ks[4], out_channels),
        "bn3": bn_params(ks[5], cexp),
        "has_shortcut": (stride != 1) or (in_channels != cexp) or use_conv,
    }
    if p["has_shortcut"]:
        p["ws"] = 0.1 * jax.random.normal(ks[6], (cexp, in_channels, 1, 1), jnp.float32)
        p["bns"] = bn_params(ks[7], cexp)
    return p


def fold_params(p, compute_dtype=jnp.float32):
    """One-time weight prep: BN folding + kernel-ready layouts (hoisted out of forward)."""
    def fold(bn):
        scale = bn["gamma"] / jnp.sqrt(bn["var"] + EPS)
        bias = bn["beta"] - bn["mean"] * scale
        return jnp.stack([scale, bias]).astype(jnp.float32)     # (2, C) f32 epilogue

    Cmid = p["w1"].shape[0]
    # w2: (O, I, 3, 3) -> (dy, dx, I, O) -> (3, 3*I, O): dx taps merged on K.
    w2 = jnp.transpose(p["w2"], (2, 3, 1, 0)).reshape(3, 3 * Cmid, Cmid)
    fp = {
        "w1": p["w1"][:, :, 0, 0].T.astype(compute_dtype),      # (Cin, Cmid)
        "w2": w2.astype(compute_dtype),                         # (3, 3*Cmid, Cmid)
        "w3": p["w3"][:, :, 0, 0].T.astype(compute_dtype),      # (Cmid, Cexp)
        "sb1": fold(p["bn1"]), "sb2": fold(p["bn2"]), "sb3": fold(p["bn3"]),
        "has_proj": bool(p["has_shortcut"]),
    }
    if p["has_shortcut"]:
        fp["ws"] = p["ws"][:, :, 0, 0].T.astype(compute_dtype)  # (Cin, Cexp)
        fp["sbs"] = fold(p["bns"])
    return fp


def bottleneck_forward(x_nchw, fp, stride):
    # TODO(synk): when chaining blocks in a full network, keep activations NHWC
    # (and in the compute dtype) end-to-end and drop these layout transposes/casts.
    x = jnp.transpose(x_nchw, (0, 2, 3, 1)).astype(fp["w1"].dtype)   # NCHW -> NHWC
    out = fused_bottleneck(x, fp, stride)
    return jnp.transpose(out, (0, 3, 1, 2))                          # NHWC -> NCHW


def bottleneck_ref(x, p, stride):
    def conv(x, w, s=1, pad=0):
        return jax.lax.conv_general_dilated(
            x, w, (s, s), [(pad, pad), (pad, pad)],
            dimension_numbers=("NCHW", "OIHW", "NCHW"))

    def bn(x, b):
        sh = (1, -1, 1, 1)
        return ((x - b["mean"].reshape(sh)) / jnp.sqrt(b["var"].reshape(sh) + EPS)
                * b["gamma"].reshape(sh) + b["beta"].reshape(sh))

    y = jax.nn.relu(bn(conv(x, p["w1"]), p["bn1"]))
    y = jax.nn.relu(bn(conv(y, p["w2"], s=stride, pad=1), p["bn2"]))
    y = bn(conv(y, p["w3"]), p["bn3"])
    sc = bn(conv(x, p["ws"], s=stride), p["bns"]) if p["has_shortcut"] else x
    return jax.nn.relu(y + sc)


if __name__ == "__main__":
    key = jax.random.PRNGKey(0)
    ks = jax.random.split(key, 6)

    # --- config 1: projection shortcut, stride 2 (f32 compute, tight tol) ---
    N, Cin, H, W = 2, 16, 8, 8
    out_ch, stride = 8, 2                                        # Cexp = 32
    x = jax.random.normal(ks[0], (N, Cin, H, W), jnp.float32)
    params = init_params(ks[1], Cin, out_ch, stride)
    fp32 = fold_params(params, jnp.float32)
    out = jax.block_until_ready(bottleneck_forward(x, fp32, stride))
    ref = bottleneck_ref(x, params, stride)
    np.testing.assert_allclose(np.asarray(out), np.asarray(ref), rtol=1e-4, atol=1e-4)
    assert out.shape == (N, out_ch * 4, H // stride, W // stride)

    # --- config 1b: same block, bf16 compute path (f32 accumulation) --------
    fpbf = fold_params(params, jnp.bfloat16)
    outb = jax.block_until_ready(bottleneck_forward(x, fpbf, stride))
    np.testing.assert_allclose(np.asarray(outb), np.asarray(ref), rtol=5e-2, atol=5e-2)

    # --- config 2: identity shortcut, stride 1 (Cin == Cexp), f32 -----------
    N2, Cin2, H2, W2 = 2, 32, 8, 8
    out_ch2, stride2 = 8, 1                                      # Cexp = 32 == Cin2
    x2 = jax.random.normal(ks[2], (N2, Cin2, H2, W2), jnp.float32)
    params2 = init_params(ks[3], Cin2, out_ch2, stride2)
    fp2 = fold_params(params2, jnp.float32)
    out2 = jax.block_until_ready(bottleneck_forward(x2, fp2, stride2))
    ref2 = bottleneck_ref(x2, params2, stride2)
    np.testing.assert_allclose(np.asarray(out2), np.asarray(ref2), rtol=1e-4, atol=1e-4)
    assert out2.shape == (N2, out_ch2 * 4, H2, W2)

    # --- config 3: projection shortcut, stride 1 (use_conv=True), f32 -------
    x3 = jax.random.normal(ks[4], (2, 16, 8, 8), jnp.float32)
    params3 = init_params(ks[5], 16, 8, 1, use_conv=True)
    fp3 = fold_params(params3, jnp.float32)
    out3 = jax.block_until_ready(bottleneck_forward(x3, fp3, 1))
    ref3 = bottleneck_ref(x3, params3, 1)
    np.testing.assert_allclose(np.asarray(out3), np.asarray(ref3), rtol=1e-4, atol=1e-4)

    print("KERNEL_OK")
</pallas_src>

<mosaic_0001>
module attributes {stable_mosaic.version = 11 : i64} {
  func.func @_bottleneck_kernel(%arg0: i32, %arg1: memref<1x8x8x16xf32, #tpu.memory_space<vmem>>, %arg2: memref<1x4x4x16xf32, #tpu.memory_space<vmem>>, %arg3: memref<16x8xf32, #tpu.memory_space<vmem>>, %arg4: memref<2x8xf32, #tpu.memory_space<vmem>>, %arg5: memref<3x24x8xf32, #tpu.memory_space<vmem>>, %arg6: memref<2x8xf32, #tpu.memory_space<vmem>>, %arg7: memref<8x32xf32, #tpu.memory_space<vmem>>, %arg8: memref<2x32xf32, #tpu.memory_space<vmem>>, %arg9: memref<16x32xf32, #tpu.memory_space<vmem>>, %arg10: memref<2x32xf32, #tpu.memory_space<vmem>>, %arg11: memref<1x4x4x32xf32, #tpu.memory_space<vmem>>, %arg12: memref<10x10x8xf32, #tpu.memory_space<vmem>>) attributes {dimension_semantics = [#tpu.dimension_semantics<parallel>], iteration_bounds = array<i64: 2>, scalar_prefetch = 0 : i64, scratch_operands = 1 : i64, tpu.core_type = #tpu.core_type<tc>, window_params = [{transform_indices = @transform_0, window_bounds = array<i64: 1, 8, 8, 16>}, {transform_indices = @transform_1, window_bounds = array<i64: 1, 4, 4, 16>}, {pipeline_mode = #tpu.pipeline_mode<synchronous>, transform_indices = @transform_2, window_bounds = array<i64: 16, 8>}, {pipeline_mode = #tpu.pipeline_mode<synchronous>, transform_indices = @transform_3, window_bounds = array<i64: 2, 8>}, {pipeline_mode = #tpu.pipeline_mode<synchronous>, transform_indices = @transform_4, window_bounds = array<i64: 3, 24, 8>}, {pipeline_mode = #tpu.pipeline_mode<synchronous>, transform_indices = @transform_5, window_bounds = array<i64: 2, 8>}, {pipeline_mode = #tpu.pipeline_mode<synchronous>, transform_indices = @transform_6, window_bounds = array<i64: 8, 32>}, {pipeline_mode = #tpu.pipeline_mode<synchronous>, transform_indices = @transform_7, window_bounds = array<i64: 2, 32>}, {pipeline_mode = #tpu.pipeline_mode<synchronous>, transform_indices = @transform_8, window_bounds = array<i64: 16, 32>}, {pipeline_mode = #tpu.pipeline_mode<synchronous>, transform_indices = @transform_9, window_bounds = array<i64: 2, 32>}, {transform_indices = @transform_10, window_bounds = array<i64: 1, 4, 4, 32>}]} {
    %cst = arith.constant 0.000000e+00 : f32
    %0 = vector.broadcast %cst : f32 to vector<1x10x8xf32>
    %c0 = arith.constant 0 : index
    %c0_0 = arith.constant 0 : index
    %c0_1 = arith.constant 0 : index
    %1 = vector.load %arg12[%c0, %c0_0, %c0_1] : memref<10x10x8xf32, #tpu.memory_space<vmem>>, vector<1x10x8xf32>
    tpu.vector_store %arg12[%c0, %c0_0, %c0_1], %0 {strides = array<i32>} : memref<10x10x8xf32, #tpu.memory_space<vmem>>, vector<1x10x8xf32>,
    %cst_2 = arith.constant 0.000000e+00 : f32
    %2 = vector.broadcast %cst_2 : f32 to vector<1x10x8xf32>
    %c9 = arith.constant 9 : index
    %c0_3 = arith.constant 0 : index
    %c0_4 = arith.constant 0 : index
    %3 = vector.load %arg12[%c9, %c0_3, %c0_4] : memref<10x10x8xf32, #tpu.memory_space<vmem>>, vector<1x10x8xf32>
    tpu.vector_store %arg12[%c9, %c0_3, %c0_4], %2 {strides = array<i32>} : memref<10x10x8xf32, #tpu.memory_space<vmem>>, vector<1x10x8xf32>,
    %cst_5 = arith.constant 0.000000e+00 : f32
    %4 = vector.broadcast %cst_5 : f32 to vector<10x1x8xf32>
    %c0_6 = arith.constant 0 : index
    %c0_7 = arith.constant 0 : index
    %c0_8 = arith.constant 0 : index
    %5 = vector.load %arg12[%c0_6, %c0_7, %c0_8] : memref<10x10x8xf32, #tpu.memory_space<vmem>>, vector<10x1x8xf32>
    tpu.vector_store %arg12[%c0_6, %c0_7, %c0_8], %4 {strides = array<i32>} : memref<10x10x8xf32, #tpu.memory_space<vmem>>, vector<10x1x8xf32>,
    %cst_9 = arith.constant 0.000000e+00 : f32
    %6 = vector.broadcast %cst_9 : f32 to vector<10x1x8xf32>
    %c0_10 = arith.constant 0 : index
    %c9_11 = arith.constant 9 : index
    %c0_12 = arith.constant 0 : index
    %7 = vector.load %arg12[%c0_10, %c9_11, %c0_12] : memref<10x10x8xf32, #tpu.memory_space<vmem>>, vector<10x1x8xf32>
    tpu.vector_store %arg12[%c0_10, %c9_11, %c0_12], %6 {strides = array<i32>} : memref<10x10x8xf32, #tpu.memory_space<vmem>>, vector<10x1x8xf32>,
    %c0_13 = arith.constant 0 : index
    %c0_14 = arith.constant 0 : index
    %8 = vector.load %arg4[%c0_13, %c0_14] : memref<2x8xf32, #tpu.memory_space<vmem>>, vector<1x8xf32>
    %c1 = arith.constant 1 : index
    %c0_15 = arith.constant 0 : index
    %9 = vector.load %arg4[%c1, %c0_15] : memref<2x8xf32, #tpu.memory_space<vmem>>, vector<1x8xf32>
    %c0_16 = arith.constant 0 : index
    %c0_17 = arith.constant 0 : index
    %10 = vector.load %arg6[%c0_16, %c0_17] : memref<2x8xf32, #tpu.memory_space<vmem>>, vector<1x8xf32>
    %c1_18 = arith.constant 1 : index
    %c0_19 = arith.constant 0 : index
    %11 = vector.load %arg6[%c1_18, %c0_19] : memref<2x8xf32, #tpu.memory_space<vmem>>, vector<1x8xf32>
    %c0_20 = arith.constant 0 : index
    %c0_21 = arith.constant 0 : index
    %12 = vector.load %arg8[%c0_20, %c0_21] : memref<2x32xf32, #tpu.memory_space<vmem>>, vector<1x32xf32>
    %c1_22 = arith.constant 1 : index
    %c0_23 = arith.constant 0 : index
    %13 = vector.load %arg8[%c1_22, %c0_23] : memref<2x32xf32, #tpu.memory_space<vmem>>, vector<1x32xf32>
    %c0_24 = arith.constant 0 : index
    %c0_25 = arith.constant 0 : index
    %14 = vector.load %arg10[%c0_24, %c0_25] : memref<2x32xf32, #tpu.memory_space<vmem>>, vector<1x32xf32>
    %c1_26 = arith.constant 1 : index
    %c0_27 = arith.constant 0 : index
    %15 = vector.load %arg10[%c1_26, %c0_27] : memref<2x32xf32, #tpu.memory_space<vmem>>, vector<1x32xf32>
    %c0_28 = arith.constant 0 : index
    %c0_29 = arith.constant 0 : index
    %16 = vector.load %arg3[%c0_28, %c0_29] : memref<16x8xf32, #tpu.memory_space<vmem>>, vector<16x8xf32>
    %c0_30 = arith.constant 0 : index
    %c0_31 = arith.constant 0 : index
    %17 = vector.load %arg7[%c0_30, %c0_31] : memref<8x32xf32, #tpu.memory_space<vmem>>, vector<8x32xf32>
    %c0_32 = arith.constant 0 : index
    %c0_33 = arith.constant 0 : index
    %18 = vector.load %arg9[%c0_32, %c0_33] : memref<16x32xf32, #tpu.memory_space<vmem>>, vector<16x32xf32>
    %c0_i32 = arith.constant 0 : i32
    %c8_i32 = arith.constant 8 : i32
    %19 = arith.muli %c0_i32, %c8_i32 : i32
    %20 = tpu.assume_multiple %19, 8 : i32
    %c0_34 = arith.constant 0 : index
    %21 = arith.index_cast %20 : i32 to index
    %c0_35 = arith.constant 0 : index
    %c0_36 = arith.constant 0 : index
    %22 = vector.load %arg1[%c0_34, %21, %c0_35, %c0_36] : memref<1x8x8x16xf32, #tpu.memory_space<vmem>>, vector<1x8x8x16xf32>
    %23 = vector.shape_cast %22 : vector<1x8x8x16xf32> to vector<8x8x16xf32>
    %24 = vector.shape_cast %23 : vector<8x8x16xf32> to vector<64x16xf32>
    %cst_37 = arith.constant dense<0.000000e+00> : vector<64x8xf32>
    %25 = tpu.matmul %24, %16, %cst_37 {dimension_numbers = #tpu.dot_dimension_numbers<[1], [0], [0], [1], [0, 0, 1, 1], [], []>} : vector<64x16xf32>, vector<16x8xf32>, vector<64x8xf32> -> vector<64x8xf32>
    %26 = vector.broadcast %8 : vector<1x8xf32> to vector<64x8xf32>
    %27 = arith.mulf %25, %26 : vector<64x8xf32>
    %28 = vector.broadcast %9 : vector<1x8xf32> to vector<64x8xf32>
    %29 = arith.addf %27, %28 : vector<64x8xf32>
    %cst_38 = arith.constant 0.000000e+00 : f32
    %30 = vector.broadcast %cst_38 : f32 to vector<64x8xf32>
    %31 = arith.maximumf %29, %30 : vector<64x8xf32>
    %32 = vector.shape_cast %31 : vector<64x8xf32> to vector<8x8x8xf32>
    %c1_i32 = arith.constant 1 : i32
    %33 = arith.addi %20, %c1_i32 : i32
    %34 = arith.index_cast %33 : i32 to index
    %c1_39 = arith.constant 1 : index
    %c0_40 = arith.constant 0 : index
    %35 = vector.load %arg12[%34, %c1_39, %c0_40] : memref<10x10x8xf32, #tpu.memory_space<vmem>>, vector<8x8x8xf32>
    tpu.vector_store %arg12[%34, %c1_39, %c0_40], %32 {strides = array<i32>} : memref<10x10x8xf32, #tpu.memory_space<vmem>>, vector<8x8x8xf32>,
    %c1_i32_41 = arith.constant 1 : i32
    %c0_i32_42 = arith.constant 0 : i32
    %c4_i32 = arith.constant 4 : i32
    %36 = arith.muli %c0_i32_42, %c4_i32 : i32
    %37 = tpu.assume_multiple %36, 4 : i32
    %c2_i32 = arith.constant 2 : i32
    %38 = arith.muli %37, %c2_i32 : i32
    %c0_i32_43 = arith.constant 0 : i32
    %39 = arith.addi %38, %c0_i32_43 : i32
    %40 = arith.index_cast %39 : i32 to index
    %c0_44 = arith.constant 0 : index
    %c0_45 = arith.constant 0 : index
    %41 = tpu.strided_load %arg12[%40, %c0_44, %c0_45] {strides = array<i32: 2, 2, 1>} : memref<10x10x8xf32, #tpu.memory_space<vmem>>, vector<4x4x8xf32>
    %c2_i32_46 = arith.constant 2 : i32
    %42 = arith.muli %37, %c2_i32_46 : i32
    %c0_i32_47 = arith.constant 0 : i32
    %43 = arith.addi %42, %c0_i32_47 : i32
    %44 = arith.index_cast %43 : i32 to index
    %c1_48 = arith.constant 1 : index
    %c0_49 = arith.constant 0 : index
    %45 = tpu.strided_load %arg12[%44, %c1_48, %c0_49] {strides = array<i32: 2, 2, 1>} : memref<10x10x8xf32, #tpu.memory_space<vmem>>, vector<4x4x8xf32>
    %c2_i32_50 = arith.constant 2 : i32
    %46 = arith.muli %37, %c2_i32_50 : i32
    %c0_i32_51 = arith.constant 0 : i32
    %47 = arith.addi %46, %c0_i32_51 : i32
    %48 = arith.index_cast %47 : i32 to index
    %c2 = arith.constant 2 : index
    %c0_52 = arith.constant 0 : index
    %49 = tpu.strided_load %arg12[%48, %c2, %c0_52] {strides = array<i32: 2, 2, 1>} : memref<10x10x8xf32, #tpu.memory_space<vmem>>, vector<4x4x8xf32>
    %50 = tpu.concatenate %41, %45, %49 in 2 : vector<4x4x8xf32>, vector<4x4x8xf32>, vector<4x4x8xf32> -> vector<4x4x24xf32>
    %51 = vector.shape_cast %50 : vector<4x4x24xf32> to vector<16x24xf32>
    %c0_53 = arith.constant 0 : index
    %c0_54 = arith.constant 0 : index
    %c0_55 = arith.constant 0 : index
    %52 = vector.load %arg5[%c0_53, %c0_54, %c0_55] : memref<3x24x8xf32, #tpu.memory_space<vmem>>, vector<1x24x8xf32>
    %53 = vector.shape_cast %52 : vector<1x24x8xf32> to vector<24x8xf32>
    %cst_56 = arith.constant dense<0.000000e+00> : vector<16x8xf32>
    %54 = tpu.matmul %51, %53, %cst_56 {dimension_numbers = #tpu.dot_dimension_numbers<[1], [0], [0], [1], [0, 0, 1, 1], [], []>} : vector<16x24xf32>, vector<24x8xf32>, vector<16x8xf32> -> vector<16x8xf32>
    %c2_i32_57 = arith.constant 2 : i32
    %55 = arith.muli %37, %c2_i32_57 : i32
    %c1_i32_58 = arith.constant 1 : i32
    %56 = arith.addi %55, %c1_i32_58 : i32
    %57 = arith.index_cast %56 : i32 to index
    %c0_59 = arith.constant 0 : index
    %c0_60 = arith.constant 0 : index
    %58 = tpu.strided_load %arg12[%57, %c0_59, %c0_60] {strides = array<i32: 2, 2, 1>} : memref<10x10x8xf32, #tpu.memory_space<vmem>>, vector<4x4x8xf32>
    %c2_i32_61 = arith.constant 2 : i32
    %59 = arith.muli %37, %c2_i32_61 : i32
    %c1_i32_62 = arith.constant 1 : i32
    %60 = arith.addi %59, %c1_i32_62 : i32
    %61 = arith.index_cast %60 : i32 to index
    %c1_63 = arith.constant 1 : index
    %c0_64 = arith.constant 0 : index
    %62 = tpu.strided_load %arg12[%61, %c1_63, %c0_64] {strides = array<i32: 2, 2, 1>} : memref<10x10x8xf32, #tpu.memory_space<vmem>>, vector<4x4x8xf32>
    %c2_i32_65 = arith.constant 2 : i32
    %63 = arith.muli %37, %c2_i32_65 : i32
    %c1_i32_66 = arith.constant 1 : i32
    %64 = arith.addi %63, %c1_i32_66 : i32
    %65 = arith.index_cast %64 : i32 to index
    %c2_67 = arith.constant 2 : index
    %c0_68 = arith.constant 0 : index
    %66 = tpu.strided_load %arg12[%65, %c2_67, %c0_68] {strides = array<i32: 2, 2, 1>} : memref<10x10x8xf32, #tpu.memory_space<vmem>>, vector<4x4x8xf32>
    %67 = tpu.concatenate %58, %62, %66 in 2 : vector<4x4x8xf32>, vector<4x4x8xf32>, vector<4x4x8xf32> -> vector<4x4x24xf32>
    %68 = vector.shape_cast %67 : vector<4x4x24xf32> to vector<16x24xf32>
    %c1_69 = arith.constant 1 : index
    %c0_70 = arith.constant 0 : index
    %c0_71 = arith.constant 0 : index
    %69 = vector.load %arg5[%c1_69, %c0_70, %c0_71] : memref<3x24x8xf32, #tpu.memory_space<vmem>>, vector<1x24x8xf32>
    %70 = vector.shape_cast %69 : vector<1x24x8xf32> to vector<24x8xf32>
    %cst_72 = arith.constant dense<0.000000e+00> : vector<16x8xf32>
    %71 = tpu.matmul %68, %70, %cst_72 {dimension_numbers = #tpu.dot_dimension_numbers<[1], [0], [0], [1], [0, 0, 1, 1], [], []>} : vector<16x24xf32>, vector<24x8xf32>, vector<16x8xf32> -> vector<16x8xf32>
    %72 = arith.addf %54, %71 : vector<16x8xf32>
    %c2_i32_73 = arith.constant 2 : i32
    %73 = arith.muli %37, %c2_i32_73 : i32
    %c2_i32_74 = arith.constant 2 : i32
    %74 = arith.addi %73, %c2_i32_74 : i32
    %75 = arith.index_cast %74 : i32 to index
    %c0_75 = arith.constant 0 : index
    %c0_76 = arith.constant 0 : index
    %76 = tpu.strided_load %arg12[%75, %c0_75, %c0_76] {strides = array<i32: 2, 2, 1>} : memref<10x10x8xf32, #tpu.memory_space<vmem>>, vector<4x4x8xf32>
    %c2_i32_77 = arith.constant 2 : i32
    %77 = arith.muli %37, %c2_i32_77 : i32
    %c2_i32_78 = arith.constant 2 : i32
    %78 = arith.addi %77, %c2_i32_78 : i32
    %79 = arith.index_cast %78 : i32 to index
    %c1_79 = arith.constant 1 : index
    %c0_80 = arith.constant 0 : index
    %80 = tpu.strided_load %arg12[%79, %c1_79, %c0_80] {strides = array<i32: 2, 2, 1>} : memref<10x10x8xf32, #tpu.memory_space<vmem>>, vector<4x4x8xf32>
    %c2_i32_81 = arith.constant 2 : i32
    %81 = arith.muli %37, %c2_i32_81 : i32
    %c2_i32_82 = arith.constant 2 : i32
    %82 = arith.addi %81, %c2_i32_82 : i32
    %83 = arith.index_cast %82 : i32 to index
    %c2_83 = arith.constant 2 : index
    %c0_84 = arith.constant 0 : index
    %84 = tpu.strided_load %arg12[%83, %c2_83, %c0_84] {strides = array<i32: 2, 2, 1>} : memref<10x10x8xf32, #tpu.memory_space<vmem>>, vector<4x4x8xf32>
    %85 = tpu.concatenate %76, %80, %84 in 2 : vector<4x4x8xf32>, vector<4x4x8xf32>, vector<4x4x8xf32> -> vector<4x4x24xf32>
    %86 = vector.shape_cast %85 : vector<4x4x24xf32> to vector<16x24xf32>
    %c2_85 = arith.constant 2 : index
    %c0_86 = arith.constant 0 : index
    %c0_87 = arith.constant 0 : index
    %87 = vector.load %arg5[%c2_85, %c0_86, %c0_87] : memref<3x24x8xf32, #tpu.memory_space<vmem>>, vector<1x24x8xf32>
    %88 = vector.shape_cast %87 : vector<1x24x8xf32> to vector<24x8xf32>
    %cst_88 = arith.constant dense<0.000000e+00> : vector<16x8xf32>
    %89 = tpu.matmul %86, %88, %cst_88 {dimension_numbers = #tpu.dot_dimension_numbers<[1], [0], [0], [1], [0, 0, 1, 1], [], []>} : vector<16x24xf32>, vector<24x8xf32>, vector<16x8xf32> -> vector<16x8xf32>
    %90 = arith.addf %72, %89 : vector<16x8xf32>
    %91 = vector.broadcast %10 : vector<1x8xf32> to vector<16x8xf32>
    %92 = arith.mulf %90, %91 : vector<16x8xf32>
    %93 = vector.broadcast %11 : vector<1x8xf32> to vector<16x8xf32>
    %94 = arith.addf %92, %93 : vector<16x8xf32>
    %cst_89 = arith.constant 0.000000e+00 : f32
    %95 = vector.broadcast %cst_89 : f32 to vector<16x8xf32>
    %96 = arith.maximumf %94, %95 : vector<16x8xf32>
    %cst_90 = arith.constant dense<0.000000e+00> : vector<16x32xf32>
    %97 = tpu.matmul %96, %17, %cst_90 {dimension_numbers = #tpu.dot_dimension_numbers<[1], [0], [0], [1], [0, 0, 1, 1], [], []>} : vector<16x8xf32>, vector<8x32xf32>, vector<16x32xf32> -> vector<16x32xf32>
    %98 = vector.broadcast %12 : vector<1x32xf32> to vector<16x32xf32>
    %99 = arith.mulf %97, %98 : vector<16x32xf32>
    %100 = vector.broadcast %13 : vector<1x32xf32> to vector<16x32xf32>
    %101 = arith.addf %99, %100 : vector<16x32xf32>
    %c0_91 = arith.constant 0 : index
    %102 = arith.index_cast %37 : i32 to index
    %c0_92 = arith.constant 0 : index
    %c0_93 = arith.constant 0 : index
    %103 = vector.load %arg2[%c0_91, %102, %c0_92, %c0_93] : memref<1x4x4x16xf32, #tpu.memory_space<vmem>>, vector<1x4x4x16xf32>
    %104 = vector.shape_cast %103 : vector<1x4x4x16xf32> to vector<4x4x16xf32>
    %105 = vector.shape_cast %104 : vector<4x4x16xf32> to vector<16x16xf32>
    %cst_94 = arith.constant dense<0.000000e+00> : vector<16x32xf32>
    %106 = tpu.matmul %105, %18, %cst_94 {dimension_numbers = #tpu.dot_dimension_numbers<[1], [0], [0], [1], [0, 0, 1, 1], [], []>} : vector<16x16xf32>, vector<16x32xf32>, vector<16x32xf32> -> vector<16x32xf32>
    %107 = vector.broadcast %14 : vector<1x32xf32> to vector<16x32xf32>
    %108 = arith.mulf %106, %107 : vector<16x32xf32>
    %109 = vector.broadcast %15 : vector<1x32xf32> to vector<16x32xf32>
    %110 = arith.addf %108, %109 : vector<16x32xf32>
    %111 = arith.addf %101, %110 : vector<16x32xf32>
    %cst_95 = arith.constant 0.000000e+00 : f32
    %112 = vector.broadcast %cst_95 : f32 to vector<16x32xf32>
    %113 = arith.maximumf %111, %112 : vector<16x32xf32>
    %114 = vector.shape_cast %113 : vector<16x32xf32> to vector<4x4x32xf32>
    %c0_96 = arith.constant 0 : index
    %115 = arith.index_cast %37 : i32 to index
    %c0_97 = arith.constant 0 : index
    %c0_98 = arith.constant 0 : index
    %116 = vector.load %arg11[%c0_96, %115, %c0_97, %c0_98] : memref<1x4x4x32xf32, #tpu.memory_space<vmem>>, vector<1x4x4x32xf32>
    %117 = vector.shape_cast %116 : vector<1x4x4x32xf32> to vector<4x4x32xf32>
    %118 = vector.shape_cast %114 : vector<4x4x32xf32> to vector<1x4x4x32xf32>
    tpu.vector_store %arg11[%c0_96, %115, %c0_97, %c0_98], %118 {strides = array<i32>} : memref<1x4x4x32xf32, #tpu.memory_space<vmem>>, vector<1x4x4x32xf32>,
    %c1_i32_99 = arith.constant 1 : i32
    return
  }
  func.func @transform_0(%arg0: i32) -> (i32, i32, i32, i32) {
    %c0_i32 = arith.constant 0 : i32
    %c0_i32_0 = arith.constant 0 : i32
    %c0_i32_1 = arith.constant 0 : i32
    %c0_i32_2 = arith.constant 0 : i32
    return %arg0, %c0_i32, %c0_i32_0, %c0_i32_1 : i32, i32, i32, i32
  }
  func.func @transform_1(%arg0: i32) -> (i32, i32, i32, i32) {
    %c0_i32 = arith.constant 0 : i32
    %c0_i32_0 = arith.constant 0 : i32
    %c0_i32_1 = arith.constant 0 : i32
    %c0_i32_2 = arith.constant 0 : i32
    return %arg0, %c0_i32, %c0_i32_0, %c0_i32_1 : i32, i32, i32, i32
  }
  func.func @transform_2(%arg0: i32) -> (i32, i32) {
    %c0_i32 = arith.constant 0 : i32
    %c0_i32_0 = arith.constant 0 : i32
    %c0_i32_1 = arith.constant 0 : i32
    return %c0_i32, %c0_i32_0 : i32, i32
  }
  func.func @transform_3(%arg0: i32) -> (i32, i32) {
    %c0_i32 = arith.constant 0 : i32
    %c0_i32_0 = arith.constant 0 : i32
    %c0_i32_1 = arith.constant 0 : i32
    return %c0_i32, %c0_i32_0 : i32, i32
  }
  func.func @transform_4(%arg0: i32) -> (i32, i32, i32) {
    %c0_i32 = arith.constant 0 : i32
    %c0_i32_0 = arith.constant 0 : i32
    %c0_i32_1 = arith.constant 0 : i32
    %c0_i32_2 = arith.constant 0 : i32
    return %c0_i32, %c0_i32_0, %c0_i32_1 : i32, i32, i32
  }
  func.func @transform_5(%arg0: i32) -> (i32, i32) {
    %c0_i32 = arith.constant 0 : i32
    %c0_i32_0 = arith.constant 0 : i32
    %c0_i32_1 = arith.constant 0 : i32
    return %c0_i32, %c0_i32_0 : i32, i32
  }
  func.func @transform_6(%arg0: i32) -> (i32, i32) {
    %c0_i32 = arith.constant 0 : i32
    %c0_i32_0 = arith.constant 0 : i32
    %c0_i32_1 = arith.constant 0 : i32
    return %c0_i32, %c0_i32_0 : i32, i32
  }
  func.func @transform_7(%arg0: i32) -> (i32, i32) {
    %c0_i32 = arith.constant 0 : i32
    %c0_i32_0 = arith.constant 0 : i32
    %c0_i32_1 = arith.constant 0 : i32
    return %c0_i32, %c0_i32_0 : i32, i32
  }
  func.func @transform_8(%arg0: i32) -> (i32, i32) {
    %c0_i32 = arith.constant 0 : i32
    %c0_i32_0 = arith.constant 0 : i32
    %c0_i32_1 = arith.constant 0 : i32
    return %c0_i32, %c0_i32_0 : i32, i32
  }
  func.func @transform_9(%arg0: i32) -> (i32, i32) {
    %c0_i32 = arith.constant 0 : i32
    %c0_i32_0 = arith.constant 0 : i32
    %c0_i32_1 = arith.constant 0 : i32
    return %c0_i32, %c0_i32_0 : i32, i32
  }
  func.func @transform_10(%arg0: i32) -> (i32, i32, i32, i32) {
    %c0_i32 = arith.constant 0 : i32
    %c0_i32_0 = arith.constant 0 : i32
    %c0_i32_1 = arith.constant 0 : i32
    %c0_i32_2 = arith.constant 0 : i32
    return %arg0, %c0_i32, %c0_i32_0, %c0_i32_1 : i32, i32, i32, i32
  }
}

</mosaic_0001>

<llo_original>
// kernel: tpu_custom_call.1
$region0: #{tpu_custom_call.1}
  #allocation0 [shape = 'u32[]', space=smem, size = 0x4, offset = 0x4, fixed_abs, tag = 'smem constant byte address 0x4 - core index']
  #allocation1 [shape = 'u32[144,128]{1,0:T(1,128)}', space=vmem, size = 0x12000, scoped, tag = 'internal scratch']
  #allocation2 [shape = 'f32[10,10,8]{2,1,0:T(8,128)}', space=vmem, size = 0x14000, scoped, tag = 'scratch operand']
  %s0 = inlined_call_operand.hbm [shape: f32[2,8,8,16], index: 0, kind: input, shape index: {}]
  %s1 = inlined_call_operand.vmem [shape: f32[2,4,4,16], index: 1, kind: input, shape index: {}]
  %s2 = inlined_call_operand.vmem [shape: f32[16,8], index: 2, kind: input, shape index: {}]
  %s3 = inlined_call_operand.vmem [shape: f32[2,8], index: 3, kind: input, shape index: {}]
  %s4 = inlined_call_operand.vmem [shape: f32[3,24,8], index: 4, kind: input, shape index: {}]
  %s5 = inlined_call_operand.vmem [shape: f32[2,8], index: 5, kind: input, shape index: {}]
  %s6 = inlined_call_operand.vmem [shape: f32[8,32], index: 6, kind: input, shape index: {}]
  %s7 = inlined_call_operand.vmem [shape: f32[2,32], index: 7, kind: input, shape index: {}]
  %s8 = inlined_call_operand.vmem [shape: f32[16,32], index: 8, kind: input, shape index: {}]
  %s9 = inlined_call_operand.vmem [shape: f32[2,32], index: 9, kind: input, shape index: {}]
  %s10 = inlined_call_operand.hbm [shape: f32[2,4,4,32], index: 10, kind: output, shape index: {}]
  %s11 = sld [smem:[#allocation0]]
  $region77: #{tpu_custom_call.1} parent=0
    _
  %s13 = ssub.s32 1, %s11
  %s14 = scalar_select 0, %s13, %s11
  $region1: #{tpu_custom_call.1} parent=0
    #allocation3 [shape = 'u8[65536]{0}', space=vmem, size = 0x10000, scoped, tag = 'input window, operand 0']
    #allocation4 [shape = 's32[2]{0}', space=sflag, size = 0x8, scoped, tag = 'scoped memory for tpu_custom_call.1']
    #allocation5 [shape = 's32[2]{0}', space=sflag, size = 0x8, scoped, tag = 'scoped memory for tpu_custom_call.1']
    #allocation6 [shape = 'u8[16384]{0}', space=vmem, size = 0x4000, scoped, tag = 'output window, operand 0']
    %15 = vsyncpa [#allocation4], 0
    %s16 = scalar_lea.sflag [#allocation4], 1
    %17 = vsyncpa %s16, 0
    %18 = vsyncpa [#allocation5], 0
    %s19 = scalar_lea.sflag [#allocation5], 1
    %20 = vsyncpa %s19, 0
    loop: start=0, step=1, limit=4
    $region2: #{tpu_custom_call.1} parent=1 // loop_pre_header
      _
    $region3: #{tpu_custom_call.1} parent=1 // loop_header
      %s22 = sphi 0, %s26
      %p23 = scmp.ge.s32.totalorder %s22, 4
      %s32 = sphi 0, %s34
      %s35 = sphi 0, %s32
      %s36 = sphi 0, %s35
      %s52 = sphi 0, %s36
      %s58 = sphi 0, %s60
      %s61 = sphi 0, %s58
      %s62 = sphi 0, %s61
      %s78 = sphi 0, %s62
      %s82 = sphi 0, %s82
      %s84 = sphi 0, %s82
      %s85 = sphi 0, %s84
      %s99 = sphi 0, %s85
      %s103 = sphi 0, %s103
      %s105 = sphi 0, %s103
      %s106 = sphi 0, %s105
      %s120 = sphi 0, %s106
      %s124 = sphi 0, %s124
      %s126 = sphi 0, %s124
      %s127 = sphi 0, %s126
      %s141 = sphi 0, %s127
      %s145 = sphi 0, %s145
      %s147 = sphi 0, %s145
      %s148 = sphi 0, %s147
      %s162 = sphi 0, %s148
      %s166 = sphi 0, %s166
      %s168 = sphi 0, %s166
      %s169 = sphi 0, %s168
      %s183 = sphi 0, %s169
      %s187 = sphi 0, %s187
      %s189 = sphi 0, %s187
      %s190 = sphi 0, %s189
      %s204 = sphi 0, %s190
      %s208 = sphi 0, %s208
      %s210 = sphi 0, %s208
      %s211 = sphi 0, %s210
      %s225 = sphi 0, %s211
      %s229 = sphi 0, %s229
      %s231 = sphi 0, %s229
      %s232 = sphi 0, %s231
      %s246 = sphi 0, %s232
      %s252 = sphi 0, %s254
      %s255 = sphi 0, %s252
      %s256 = sphi 0, %s255
      %s272 = sphi 0, %s256
    $region4: #{tpu_custom_call.1} parent=1 // loop_header_branch
      %25 = sbr.rel (%p23) target = $region8
    $region5: #{tpu_custom_call.1} parent=1 // loop_body
      %s27 = ssub.s32 %s22, 1
      %s28 = ssub.s32 %s22, 2
      %s29 = sadd.s32 %s22, 1
      %s30 = ssub.s32 %s22, %s29
      %p31 = scmp.eq.s32.totalorder %s30, 0
      %s33 = sadd.s32 %s32, 1
      %s34 = scalar_select %p31, %s32, %s33
      %p37 = pneg %p31
      %p38 = scmp.eq.s32.totalorder %s22, 1
      %p39 = por %p37, %p38
      %p40 = scmp.ne.s32.totalorder %s32, %s35
      %p41 = scmp.eq.s32.totalorder %s22, 0
      %p42 = por %p40, %p41
      %p43 = scmp.ne.s32.totalorder %s32, %s35
      %p44 = scmp.eq.s32.totalorder %s27, 1
      %p45 = por %p43, %p44
      %p46 = scmp.ne.s32.totalorder %s35, %s36
      %p47 = scmp.eq.s32.totalorder %s27, 0
      %p48 = por %p46, %p47
      %p49 = scmp.ne.s32.totalorder %s35, %s36
      %p50 = scmp.eq.s32.totalorder %s28, 1
      %p51 = por %p49, %p50
      %p53 = scmp.ne.s32.totalorder %s36, %s52
      %p54 = scmp.eq.s32.totalorder %s28, 0
      %p55 = por %p53, %p54
      %s56 = ssub.s32 %s22, %s29
      %p57 = scmp.eq.s32.totalorder %s56, 0
      %s59 = sadd.s32 %s58, 1
      %s60 = scalar_select %p57, %s58, %s59
      %p63 = pneg %p57
      %p64 = scmp.eq.s32.totalorder %s22, 1
      %p65 = por %p63, %p64
      %p66 = scmp.ne.s32.totalorder %s58, %s61
      %p67 = scmp.eq.s32.totalorder %s22, 0
      %p68 = por %p66, %p67
      %p69 = scmp.ne.s32.totalorder %s58, %s61
      %p70 = scmp.eq.s32.totalorder %s27, 1
      %p71 = por %p69, %p70
      %p72 = scmp.ne.s32.totalorder %s61, %s62
      %p73 = scmp.eq.s32.totalorder %s27, 0
      %p74 = por %p72, %p73
      %p75 = scmp.ne.s32.totalorder %s61, %s62
      %p76 = scmp.eq.s32.totalorder %s28, 1
      %p77 = por %p75, %p76
      %p79 = scmp.ne.s32.totalorder %s62, %s78
      %p80 = scmp.eq.s32.totalorder %s28, 0
      %p81 = por %p79, %p80
      %s83 = sadd.s32 %s82, 1
      %p86 = scmp.eq.s32.totalorder %s22, 1
      %p87 = scmp.ne.s32.totalorder %s82, %s84
      %p88 = scmp.eq.s32.totalorder %s22, 0
      %p89 = por %p87, %p88
      %p90 = scmp.ne.s32.totalorder %s82, %s84
      %p91 = scmp.eq.s32.totalorder %s27, 1
      %p92 = por %p90, %p91
      %p93 = scmp.ne.s32.totalorder %s84, %s85
      %p94 = scmp.eq.s32.totalorder %s27, 0
      %p95 = por %p93, %p94
      %p96 = scmp.ne.s32.totalorder %s84, %s85
      %p97 = scmp.eq.s32.totalorder %s28, 1
      %p98 = por %p96, %p97
      %p100 = scmp.ne.s32.totalorder %s85, %s99
      %p101 = scmp.eq.s32.totalorder %s28, 0
      %p102 = por %p100, %p101
      %s104 = sadd.s32 %s103, 1
      %p107 = scmp.eq.s32.totalorder %s22, 1
      %p108 = scmp.ne.s32.totalorder %s103, %s105
      %p109 = scmp.eq.s32.totalorder %s22, 0
      %p110 = por %p108, %p109
      %p111 = scmp.ne.s32.totalorder %s103, %s105
      %p112 = scmp.eq.s32.totalorder %s27, 1
      %p113 = por %p111, %p112
      %p114 = scmp.ne.s32.totalorder %s105, %s106
      %p115 = scmp.eq.s32.totalorder %s27, 0
      %p116 = por %p114, %p115
      %p117 = scmp.ne.s32.totalorder %s105, %s106
      %p118 = scmp.eq.s32.totalorder %s28, 1
      %p119 = por %p117, %p118
      %p121 = scmp.ne.s32.totalorder %s106, %s120
      %p122 = scmp.eq.s32.totalorder %s28, 0
      %p123 = por %p121, %p122
      %s125 = sadd.s32 %s124, 1
      %p128 = scmp.eq.s32.totalorder %s22, 1
      %p129 = scmp.ne.s32.totalorder %s124, %s126
      %p130 = scmp.eq.s32.totalorder %s22, 0
      %p131 = por %p129, %p130
      %p132 = scmp.ne.s32.totalorder %s124, %s126
      %p133 = scmp.eq.s32.totalorder %s27, 1
      %p134 = por %p132, %p133
      %p135 = scmp.ne.s32.totalorder %s126, %s127
      %p136 = scmp.eq.s32.totalorder %s27, 0
      %p137 = por %p135, %p136
      %p138 = scmp.ne.s32.totalorder %s126, %s127
      %p139 = scmp.eq.s32.totalorder %s28, 1
      %p140 = por %p138, %p139
      %p142 = scmp.ne.s32.totalorder %s127, %s141
      %p143 = scmp.eq.s32.totalorder %s28, 0
      %p144 = por %p142, %p143
      %s146 = sadd.s32 %s145, 1
      %p149 = scmp.eq.s32.totalorder %s22, 1
      %p150 = scmp.ne.s32.totalorder %s145, %s147
      %p151 = scmp.eq.s32.totalorder %s22, 0
      %p152 = por %p150, %p151
      %p153 = scmp.ne.s32.totalorder %s145, %s147
      %p154 = scmp.eq.s32.totalorder %s27, 1
      %p155 = por %p153, %p154
      %p156 = scmp.ne.s32.totalorder %s147, %s148
      %p157 = scmp.eq.s32.totalorder %s27, 0
      %p158 = por %p156, %p157
      %p159 = scmp.ne.s32.totalorder %s147, %s148
      %p160 = scmp.eq.s32.totalorder %s28, 1
      %p161 = por %p159, %p160
      %p163 = scmp.ne.s32.totalorder %s148, %s162
      %p164 = scmp.eq.s32.totalorder %s28, 0
      %p165 = por %p163, %p164
      %s167 = sadd.s32 %s166, 1
      %p170 = scmp.eq.s32.totalorder %s22, 1
      %p171 = scmp.ne.s32.totalorder %s166, %s168
      %p172 = scmp.eq.s32.totalorder %s22, 0
      %p173 = por %p171, %p172
      %p174 = scmp.ne.s32.totalorder %s166, %s168
      %p175 = scmp.eq.s32.totalorder %s27, 1
      %p176 = por %p174, %p175
      %p177 = scmp.ne.s32.totalorder %s168, %s169
      %p178 = scmp.eq.s32.totalorder %s27, 0
      %p179 = por %p177, %p178
      %p180 = scmp.ne.s32.totalorder %s168, %s169
      %p181 = scmp.eq.s32.totalorder %s28, 1
      %p182 = por %p180, %p181
      %p184 = scmp.ne.s32.totalorder %s169, %s183
      %p185 = scmp.eq.s32.totalorder %s28, 0
      %p186 = por %p184, %p185
      %s188 = sadd.s32 %s187, 1
      %p191 = scmp.eq.s32.totalorder %s22, 1
      %p192 = scmp.ne.s32.totalorder %s187, %s189
      %p193 = scmp.eq.s32.totalorder %s22, 0
      %p194 = por %p192, %p193
      %p195 = scmp.ne.s32.totalorder %s187, %s189
      %p196 = scmp.eq.s32.totalorder %s27, 1
      %p197 = por %p195, %p196
      %p198 = scmp.ne.s32.totalorder %s189, %s190
      %p199 = scmp.eq.s32.totalorder %s27, 0
      %p200 = por %p198, %p199
      %p201 = scmp.ne.s32.totalorder %s189, %s190
      %p202 = scmp.eq.s32.totalorder %s28, 1
      %p203 = por %p201, %p202
      %p205 = scmp.ne.s32.totalorder %s190, %s204
      %p206 = scmp.eq.s32.totalorder %s28, 0
      %p207 = por %p205, %p206
      %s209 = sadd.s32 %s208, 1
      %p212 = scmp.eq.s32.totalorder %s22, 1
      %p213 = scmp.ne.s32.totalorder %s208, %s210
      %p214 = scmp.eq.s32.totalorder %s22, 0
      %p215 = por %p213, %p214
      %p216 = scmp.ne.s32.totalorder %s208, %s210
      %p217 = scmp.eq.s32.totalorder %s27, 1
      %p218 = por %p216, %p217
      %p219 = scmp.ne.s32.totalorder %s210, %s211
      %p220 = scmp.eq.s32.totalorder %s27, 0
      %p221 = por %p219, %p220
      %p222 = scmp.ne.s32.totalorder %s210, %s211
      %p223 = scmp.eq.s32.totalorder %s28, 1
      %p224 = por %p222, %p223
      %p226 = scmp.ne.s32.totalorder %s211, %s225
      %p227 = scmp.eq.s32.totalorder %s28, 0
      %p228 = por %p226, %p227
      %s230 = sadd.s32 %s229, 1
      %p233 = scmp.eq.s32.totalorder %s22, 1
      %p234 = scmp.ne.s32.totalorder %s229, %s231
      %p235 = scmp.eq.s32.totalorder %s22, 0
      %p236 = por %p234, %p235
      %p237 = scmp.ne.s32.totalorder %s229, %s231
      %p238 = scmp.eq.s32.totalorder %s27, 1
      %p239 = por %p237, %p238
      %p240 = scmp.ne.s32.totalorder %s231, %s232
      %p241 = scmp.eq.s32.totalorder %s27, 0
      %p242 = por %p240, %p241
      %p243 = scmp.ne.s32.totalorder %s231, %s232
      %p244 = scmp.eq.s32.totalorder %s28, 1
      %p245 = por %p243, %p244
      %p247 = scmp.ne.s32.totalorder %s232, %s246
      %p248 = scmp.eq.s32.totalorder %s28, 0
      %p249 = por %p247, %p248
      %s250 = ssub.s32 %s22, %s29
      %p251 = scmp.eq.s32.totalorder %s250, 0
      %s253 = sadd.s32 %s252, 1
      %s254 = scalar_select %p251, %s252, %s253
      %p257 = pneg %p251
      %p258 = scmp.eq.s32.totalorder %s22, 1
      %p259 = por %p257, %p258
      %p260 = scmp.ne.s32.totalorder %s252, %s255
      %p261 = scmp.eq.s32.totalorder %s22, 0
      %p262 = por %p260, %p261
      %p263 = scmp.ne.s32.totalorder %s252, %s255
      %p264 = scmp.eq.s32.totalorder %s27, 1
      %p265 = por %p263, %p264
      %p266 = scmp.ne.s32.totalorder %s255, %s256
      %p267 = scmp.eq.s32.totalorder %s27, 0
      %p268 = por %p266, %p267
      %p269 = scmp.ne.s32.totalorder %s255, %s256
      %p270 = scmp.eq.s32.totalorder %s28, 1
      %p271 = por %p269, %p270
      %p273 = scmp.ne.s32.totalorder %s256, %s272
      %p274 = scmp.eq.s32.totalorder %s28, 0
      %p275 = por %p273, %p274
      %p276 = scmp.le.s32.totalorder 1, %s22
      %p277 = scmp.lt.s32.totalorder %s22, 3
      %p278 = pnand %p276, %p277
      %p279 = pneg %p278
      // Predicated region
      $region9: #{tpu_custom_call.1} parent=5 // pred_check
        _
      $region10: #{tpu_custom_call.1} parent=5 // pred_check_branch
        %281 = sbr.rel (%p278) target = $region12
      $region11: #{tpu_custom_call.1} parent=5 // pred_region
        %s282 = ssub.s32 %s22, 1
        // Predicated region
        $region13: #{tpu_custom_call.1} parent=11 // pred_check
          %p283 = pneg %p95
        $region14: #{tpu_custom_call.1} parent=11 // pred_check_branch
          %285 = sbr.rel (%p283) target = $region16
        $region15: #{tpu_custom_call.1} parent=11 // pred_region
          _
        $region16: #{tpu_custom_call.1} parent=11 // pred_fallthru
          _
        // Predicated region
        $region17: #{tpu_custom_call.1} parent=11 // pred_check
          %p286 = pneg %p116
        $region18: #{tpu_custom_call.1} parent=11 // pred_check_branch
          %288 = sbr.rel (%p286) target = $region20
        $region19: #{tpu_custom_call.1} parent=11 // pred_region
          _
        $region20: #{tpu_custom_call.1} parent=11 // pred_fallthru
          _
        // Predicated region
        $region21: #{tpu_custom_call.1} parent=11 // pred_check
          %p289 = pneg %p137
        $region22: #{tpu_custom_call.1} parent=11 // pred_check_branch
          %291 = sbr.rel (%p289) target = $region24
        $region23: #{tpu_custom_call.1} parent=11 // pred_region
          _
        $region24: #{tpu_custom_call.1} parent=11 // pred_fallthru
          _
        // Predicated region
        $region25: #{tpu_custom_call.1} parent=11 // pred_check
          %p292 = pneg %p158
        $region26: #{tpu_custom_call.1} parent=11 // pred_check_branch
          %294 = sbr.rel (%p292) target = $region28
        $region27: #{tpu_custom_call.1} parent=11 // pred_region
          _
        $region28: #{tpu_custom_call.1} parent=11 // pred_fallthru
          _
        // Predicated region
        $region29: #{tpu_custom_call.1} parent=11 // pred_check
          %p295 = pneg %p179
        $region30: #{tpu_custom_call.1} parent=11 // pred_check_branch
          %297 = sbr.rel (%p295) target = $region32
        $region31: #{tpu_custom_call.1} parent=11 // pred_region
          _
        $region32: #{tpu_custom_call.1} parent=11 // pred_fallthru
          _
        // Predicated region
        $region33: #{tpu_custom_call.1} parent=11 // pred_check
          %p298 = pneg %p200
        $region34: #{tpu_custom_call.1} parent=11 // pred_check_branch
          %300 = sbr.rel (%p298) target = $region36
        $region35: #{tpu_custom_call.1} parent=11 // pred_region
          _
        $region36: #{tpu_custom_call.1} parent=11 // pred_fallthru
          _
        // Predicated region
        $region37: #{tpu_custom_call.1} parent=11 // pred_check
          %p301 = pneg %p221
        $region38: #{tpu_custom_call.1} parent=11 // pred_check_branch
          %303 = sbr.rel (%p301) target = $region40
        $region39: #{tpu_custom_call.1} parent=11 // pred_region
          _
        $region40: #{tpu_custom_call.1} parent=11 // pred_fallthru
          _
        // Predicated region
        $region41: #{tpu_custom_call.1} parent=11 // pred_check
          %p304 = pneg %p242
        $region42: #{tpu_custom_call.1} parent=11 // pred_check_branch
          %306 = sbr.rel (%p304) target = $region44
        $region43: #{tpu_custom_call.1} parent=11 // pred_region
          _
        $region44: #{tpu_custom_call.1} parent=11 // pred_fallthru
          _
      $region12: #{tpu_custom_call.1} parent=5 // pred_fallthru
        _
      %p307 = scmp.lt.s32.totalorder %s22, 2
      // Predicated region
      $region45: #{tpu_custom_call.1} parent=5 // pred_check
        %p308 = pneg %p307
      $region46: #{tpu_custom_call.1} parent=5 // pred_check_branch
        %310 = sbr.rel (%p308) target = $region48
      $region47: #{tpu_custom_call.1} parent=5 // pred_region
        // Predicated region
        $region49: #{tpu_custom_call.1} parent=47 // pred_check
          %p311 = pneg %p42
        $region50: #{tpu_custom_call.1} parent=47 // pred_check_branch
          %313 = sbr.rel (%p311) target = $region52
        $region51: #{tpu_custom_call.1} parent=47 // pred_region
          %s314 = sand.u32 %s32, 1
          %s315 = scalar_lea.sflag [#allocation4], %s314
          %s316 = sand.u32 %s32, 1
          %s317 = smul.addr %s316, 64
          %s318 = scalar_lea.vmem [#allocation3], %s317
          %s320 = ssub.s32 1024, 1024
          %321 = vsyncadd %s315, %s320
          %s322 = smul.addr %s22, 8
          %s323 = smul.addr %s322, 128
          %s324 = scalar_lea.hbm %s0, %s323
          %s325 = sshll.u32 %s318, 4
          %s326 = int_to_ptr.vmem [resolvable:$true] %s325
          %331 = dma.hbm_to_vmem [thread:$0]  %s324, 1024, %s326, %s315, 128, 128, 8
        $region52: #{tpu_custom_call.1} parent=47 // pred_fallthru
          _
        // Predicated region
        $region53: #{tpu_custom_call.1} parent=47 // pred_check
          %p332 = pneg %p68
        $region54: #{tpu_custom_call.1} parent=47 // pred_check_branch
          %334 = sbr.rel (%p332) target = $region56
        $region55: #{tpu_custom_call.1} parent=47 // pred_region
          %p335 = scmp.lt.s32.totalorder %s22, 1
          %s336 = scalar_select %p335, %s22, 1
          %s337 = smul.addr %s336, 4
          %s338 = smul.addr %s337, 4
          %s339 = scalar_lea.vmem %s1, %s338
        $region56: #{tpu_custom_call.1} parent=47 // pred_fallthru
          _
      $region48: #{tpu_custom_call.1} parent=5 // pred_fallthru
        _
      %p340 = scmp.le.s32.totalorder 1, %s22
      %p341 = scmp.lt.s32.totalorder %s22, 3
      %p342 = pnand %p340, %p341
      %p343 = pneg %p342
      // Predicated region
      $region57: #{tpu_custom_call.1} parent=5 // pred_check
        _
      $region58: #{tpu_custom_call.1} parent=5 // pred_check_branch
        %345 = sbr.rel (%p342) target = $region60
      $region59: #{tpu_custom_call.1} parent=5 // pred_region
        %s346 = ssub.s32 %s22, 1
        %s347 = sand.u32 %s35, 1
        %s348 = scalar_lea.sflag [#allocation4], %s347
        %s349 = sand.u32 %s35, 1
        %s350 = smul.addr %s349, 64
        %s351 = scalar_lea.vmem [#allocation3], %s350
        // Predicated region
        $region61: #{tpu_custom_call.1} parent=59 // pred_check
          %p352 = pneg %p48
        $region62: #{tpu_custom_call.1} parent=59 // pred_check_branch
          %354 = sbr.rel (%p352) target = $region64
        $region63: #{tpu_custom_call.1} parent=59 // pred_region
          %355 = dma.done %s348, 1024
        $region64: #{tpu_custom_call.1} parent=59 // pred_fallthru
          _
        %s356 = sand.u32 %s35, 1
        %s357 = scalar_lea.sflag [#allocation4], %s356
        %s358 = sand.u32 %s35, 1
        %s359 = smul.addr %s358, 64
        %s360 = scalar_lea.vmem [#allocation3], %s359
        %p361 = pneg %p48
        %p362 = pneg %p45
        %p363 = scmp.lt.s32.totalorder %s27, 1
        %s364 = scalar_select %p363, %s27, 1
        %s365 = smul.addr %s364, 4
        %s366 = smul.addr %s365, 4
        %s367 = scalar_lea.vmem %s1, %s366
        %p368 = pneg %p74
        %p369 = pneg %p71
        %p370 = pneg %p95
        %p371 = pneg %p92
        %p372 = pneg %p116
        %p373 = pneg %p113
        %p374 = pneg %p137
        %p375 = pneg %p134
        %p376 = pneg %p158
        %p377 = pneg %p155
        %p378 = pneg %p179
        %p379 = pneg %p176
        %p380 = pneg %p200
        %p381 = pneg %p197
        %p382 = pneg %p221
        %p383 = pneg %p218
        %p384 = pneg %p242
        %p385 = pneg %p239
        %p386 = pneg %p268
        %p387 = pneg %p265
        %s388 = sand.u32 %s255, 1
        %s389 = scalar_lea.sflag [#allocation5], %s388
        %s390 = sand.u32 %s255, 1
        %s391 = smul.addr %s390, 16
        %s392 = scalar_lea.vmem [#allocation6], %s391
        %p393 = scmp.lt.s32.totalorder %s27, 1
        %s394 = scalar_select %p393, %s27, 1
        %s395 = smul.addr %s394, 4
        %s396 = smul.addr %s395, 4
        %s397 = scalar_lea.vmem %s1, %s396
        %vm398 = vcmask 64512
        %399 = vst.msk [vmem:[#allocation2] sm:$0xff] %vm398, 0.0
        %vm400 = vcmask 58368
        %401 = vst.msk [vmem:[#allocation2 + $0x8] sm:$0x3] %vm400, 0.0
        %s402 = scalar_lea.vmem [#allocation2], 144
        %403 = vst.msk [vmem:[%s402] sm:$0xff] %vm398, 0.0
        %404 = vst.msk [vmem:[%s402 + $0x8] sm:$0x3] %vm400, 0.0
        %vm405 = vcmask 57344
        %406 = vst.msk [vmem:[#allocation2] sm:$0x1] %vm405, 0.0
        %407 = vst.msk [vmem:[#allocation2 + $0x10] sm:$0x1] %vm405, 0.0
        %408 = vst.msk [vmem:[#allocation2 + $0x20] sm:$0x1] %vm405, 0.0
        %409 = vst.msk [vmem:[#allocation2 + $0x30] sm:$0x1] %vm405, 0.0
        %410 = vst.msk [vmem:[#allocation2 + $0x40] sm:$0x1] %vm405, 0.0
        %411 = vst.msk [vmem:[#allocation2 + $0x50] sm:$0x1] %vm405, 0.0
        %412 = vst.msk [vmem:[#allocation2 + $0x60] sm:$0x1] %vm405, 0.0
        %413 = vst.msk [vmem:[#allocation2 + $0x70] sm:$0x1] %vm405, 0.0
        %414 = vst.msk [vmem:[#allocation2 + $0x80] sm:$0x1] %vm405, 0.0
        %415 = vst.msk [vmem:[#allocation2 + $0x90] sm:$0x1] %vm405, 0.0
        %416 = vst.msk [vmem:[#allocation2 + $0x9] sm:$0x1] %vm405, 0.0
        %417 = vst.msk [vmem:[#allocation2 + $0x19] sm:$0x1] %vm405, 0.0
        %418 = vst.msk [vmem:[#allocation2 + $0x29] sm:$0x1] %vm405, 0.0
        %419 = vst.msk [vmem:[#allocation2 + $0x39] sm:$0x1] %vm405, 0.0
        %420 = vst.msk [vmem:[#allocation2 + $0x49] sm:$0x1] %vm405, 0.0
        %421 = vst.msk [vmem:[#allocation2 + $0x59] sm:$0x1] %vm405, 0.0
        %422 = vst.msk [vmem:[#allocation2 + $0x69] sm:$0x1] %vm405, 0.0
        %423 = vst.msk [vmem:[#allocation2 + $0x79] sm:$0x1] %vm405, 0.0
        %424 = vst.msk [vmem:[#allocation2 + $0x89] sm:$0x1] %vm405, 0.0
        %425 = vst.msk [vmem:[#allocation2 + $0x99] sm:$0x1] %vm405, 0.0
        %v426 = vld [vmem:[%s3] sm:$0x1]
        %v427 = vld [vmem:[%s3 + $0x1] sm:$0x1]
        %v428 = vld [vmem:[%s5] sm:$0x1]
        %v429 = vld [vmem:[%s5 + $0x1] sm:$0x1]
        %v430 = vld [vmem:[%s7] sm:$0x1]
        %v431 = vld [vmem:[%s7 + $0x1] sm:$0x1]
        %v432 = vld [vmem:[%s9] sm:$0x1]
        %v433 = vld [vmem:[%s9 + $0x1] sm:$0x1]
        %v434 = vld [vmem:[%s2] sm:$0xff]
        %v435 = vld [vmem:[%s2 + $0x8] sm:$0xff]
        %v436 = vld [vmem:[%s6] sm:$0xff]
        %v437 = vld [vmem:[%s8] sm:$0xff]
        %v438 = vld [vmem:[%s8 + $0x8] sm:$0xff]
        %s439 = smul.u32 0, 8
        %s440 = scalar_lea.vmem %s351, %s439 [#allocation3]
        %v441 = vld [vmem:[%s440] sm:$0xff]
        %v442 = vld [vmem:[%s440 + $0x8] sm:$0xff]
        %v443 = vld [vmem:[%s440 + $0x10] sm:$0xff]
        %v444 = vld [vmem:[%s440 + $0x18] sm:$0xff]
        %v445 = vld [vmem:[%s440 + $0x20] sm:$0xff]
        %v446 = vld [vmem:[%s440 + $0x28] sm:$0xff]
        %v447 = vld [vmem:[%s440 + $0x30] sm:$0xff]
        %v448 = vld [vmem:[%s440 + $0x38] sm:$0xff]
        %vm449 = vcmask 130048
        %v451 = vsel %vm449, %v441, 0
        %v454 = vsel %vm449, %v442, 0
        %v457 = vsel %vm449, %v443, 0
        %v460 = vsel %vm449, %v444, 0
        %v463 = vsel %vm449, %v445, 0
        %v466 = vsel %vm449, %v446, 0
        %v469 = vsel %vm449, %v447, 0
        %v472 = vsel %vm449, %v448, 0
        %474 = vmatprep.subr.mxu0 0.0
        %475 = vmatpush1.msra.mxu0 %v434
        %476 = vmatprep.subr.mxu0 0.0
        %477 = vmatpush1.msra.mxu0 %v435
        %478 = vmatprep.subr.mxu0 0.0
        %479 = vmatpush1.msra.mxu0 0.0
        %480 = vmatprep.subr.mxu0 0.0
        %481 = vmatpush1.msra.mxu0 0.0
        %482 = vmatprep.subr.mxu0 0.0
        %483 = vmatpush1.msra.mxu0 0.0
        %484 = vmatprep.subr.mxu0 0.0
        %485 = vmatpush1.msra.mxu0 0.0
        %486 = vmatprep.subr.mxu0 0.0
        %487 = vmatpush1.msra.mxu0 0.0
        %488 = vmatprep.subr.mxu0 0.0
        %489 = vmatpush1.msra.mxu0 0.0
        %490 = vmatprep.subr.mxu0 0.0
        %491 = vmatpush1.msra.mxu0 0.0
        %492 = vmatprep.subr.mxu0 0.0
        %493 = vmatpush1.msra.mxu0 0.0
        %494 = vmatprep.subr.mxu0 0.0
        %495 = vmatpush1.msra.mxu0 0.0
        %496 = vmatprep.subr.mxu0 0.0
        %497 = vmatpush1.msra.mxu0 0.0
        %498 = vmatprep.subr.mxu0 0.0
        %499 = vmatpush1.msra.mxu0 0.0
        %500 = vmatprep.subr.mxu0 0.0
        %501 = vmatpush1.msra.mxu0 0.0
        %502 = vmatprep.subr.mxu0 0.0
        %503 = vmatpush1.msra.mxu0 0.0
        %504 = vmatprep.subr.mxu0 0.0
        %505 = vmatpush1.msra.mxu0 0.0
        %506 = vmatprep.subr.mxu0 0.0
        %507 = vmatpush1.msra.mxu0 0.0
        %508 = vmatprep.subr.mxu0 0.0
        %509 = vmatpush1.msra.mxu0 0.0
        %510 = vmatprep.subr.mxu0 0.0
        %511 = vmatpush1.msra.mxu0 0.0
        %512 = vmatprep.subr.mxu0 0.0
        %513 = vmatpush1.msra.mxu0 0.0
        %514 = vmatprep.subr.mxu0 0.0
        %515 = vmatpush1.msra.mxu0 0.0
        %516 = vmatprep.subr.mxu0 0.0
        %517 = vmatpush1.msra.mxu0 0.0
        %518 = vmatprep.subr.mxu0 0.0
        %519 = vmatpush1.msra.mxu0 0.0
        %520 = vmatprep.subr.mxu0 0.0
        %521 = vmatpush1.msra.mxu0 0.0
        %522 = vmatprep.subr.mxu0 0.0
        %523 = vmatpush1.msra.mxu0 0.0
        %524 = vmatprep.subr.mxu0 0.0
        %525 = vmatpush1.msra.mxu0 0.0
        %526 = vmatprep.subr.mxu0 0.0
        %527 = vmatpush1.msra.mxu0 0.0
        %528 = vmatprep.subr.mxu0 0.0
        %529 = vmatpush1.msra.mxu0 0.0
        %530 = vmatprep.subr.mxu0 0.0
        %531 = vmatpush1.msra.mxu0 0.0
        %532 = vmatprep.subr.mxu0 0.0
        %533 = vmatpush1.msra.mxu0 0.0
        %534 = vmatprep.subr.mxu0 0.0
        %535 = vmatpush1.msra.mxu0 0.0
        %536 = vmatprep.subr.mxu0 0.0
        %537 = vmatpush1.msra.mxu0 0.0
        %538 = vmatprep.mubr.f32.mxu0 0.0
        %539 = vmatmul.mubr.f32.gmra.mrb[0].mxu0 %v451
        %v540 = vpop.f32.mrb[0].mxu0
        %v541 = vadd.f32 0.0, %v540
        %v542 = vpop.f32.mrb[0].mxu0
        %543 = vmatprep.mubr.f32.mxu0 0.0
        %544 = vmatmul.mubr.f32.gmra.mrb[0].mxu0 %v454
        %v545 = vpop.f32.mrb[0].mxu0
        %v546 = vadd.f32 0.0, %v545
        %v547 = vpop.f32.mrb[0].mxu0
        %548 = vmatprep.mubr.f32.mxu0 0.0
        %549 = vmatmul.mubr.f32.gmra.mrb[0].mxu0 %v457
        %v550 = vpop.f32.mrb[0].mxu0
        %v551 = vadd.f32 0.0, %v550
        %v552 = vpop.f32.mrb[0].mxu0
        %553 = vmatprep.mubr.f32.mxu0 0.0
        %554 = vmatmul.mubr.f32.gmra.mrb[0].mxu0 %v460
        %v555 = vpop.f32.mrb[0].mxu0
        %v556 = vadd.f32 0.0, %v555
        %v557 = vpop.f32.mrb[0].mxu0
        %558 = vmatprep.mubr.f32.mxu0 0.0
        %559 = vmatmul.mubr.f32.gmra.mrb[0].mxu0 %v463
        %v560 = vpop.f32.mrb[0].mxu0
        %v561 = vadd.f32 0.0, %v560
        %v562 = vpop.f32.mrb[0].mxu0
        %563 = vmatprep.mubr.f32.mxu0 0.0
        %564 = vmatmul.mubr.f32.gmra.mrb[0].mxu0 %v466
        %v565 = vpop.f32.mrb[0].mxu0
        %v566 = vadd.f32 0.0, %v565
        %v567 = vpop.f32.mrb[0].mxu0
        %568 = vmatprep.mubr.f32.mxu0 0.0
        %569 = vmatmul.mubr.f32.gmra.mrb[0].mxu0 %v469
        %v570 = vpop.f32.mrb[0].mxu0
        %v571 = vadd.f32 0.0, %v570
        %v572 = vpop.f32.mrb[0].mxu0
        %573 = vmatprep.mubr.f32.mxu0 0.0
        %574 = vmatmul.mubr.f32.gmra.mrb[0].mxu0 %v472
        %v575 = vpop.f32.mrb[0].mxu0
        %v576 = vadd.f32 0.0, %v575
        %v577 = vpop.f32.mrb[0].mxu0
        %578 = vdwg.mxu0
        %v579 = vlaneseq
        %v580 = vshrl.u32 %v579, 7
        %v581 = vsub.s32 0, %v580
        %v582 = vrot.slane %v426, %v581
        %v583 = vmul.f32 %v541, %v582
        %v584 = vmul.f32 %v546, %v582
        %v585 = vmul.f32 %v551, %v582
        %v586 = vmul.f32 %v556, %v582
        %v587 = vmul.f32 %v561, %v582
        %v588 = vmul.f32 %v566, %v582
        %v589 = vmul.f32 %v571, %v582
        %v590 = vmul.f32 %v576, %v582
        %v591 = vlaneseq
        %v592 = vshrl.u32 %v591, 7
        %v593 = vsub.s32 0, %v592
        %v594 = vrot.slane %v427, %v593
        %v595 = vadd.f32 %v583, %v594
        %v596 = vadd.f32 %v584, %v594
        %v597 = vadd.f32 %v585, %v594
        %v598 = vadd.f32 %v586, %v594
        %v599 = vadd.f32 %v587, %v594
        %v600 = vadd.f32 %v588, %v594
        %v601 = vadd.f32 %v589, %v594
        %v602 = vadd.f32 %v590, %v594
        %v603 = vmax.f32 %v595, 0.0
        %v604 = vmax.f32 %v596, 0.0
        %v605 = vmax.f32 %v597, 0.0
        %v606 = vmax.f32 %v598, 0.0
        %v607 = vmax.f32 %v599, 0.0
        %v608 = vmax.f32 %v600, 0.0
        %v609 = vmax.f32 %v601, 0.0
        %v610 = vmax.f32 %v602, 0.0
        %s611 = sadd.s32 0, 1
        %s612 = smul.u32 %s611, 16
        %s613 = scalar_lea.vmem [#allocation2], %s612
        %614 = vst.msk [vmem:[%s613 + $0x1] sm:$0xff] %vm398, %v603
        %615 = vst.msk [vmem:[%s613 + $0x11] sm:$0xff] %vm398, %v604
        %616 = vst.msk [vmem:[%s613 + $0x21] sm:$0xff] %vm398, %v605
        %617 = vst.msk [vmem:[%s613 + $0x31] sm:$0xff] %vm398, %v606
        %618 = vst.msk [vmem:[%s613 + $0x41] sm:$0xff] %vm398, %v607
        %619 = vst.msk [vmem:[%s613 + $0x51] sm:$0xff] %vm398, %v608
        %620 = vst.msk [vmem:[%s613 + $0x61] sm:$0xff] %vm398, %v609
        %621 = vst.msk [vmem:[%s613 + $0x71] sm:$0xff] %vm398, %v610
        %s622 = smul.u32 0, 2
        %s623 = smul.u32 %s622, 16
        %s624 = scalar_lea.vmem [#allocation2], %s623
        %v625 = vld [vmem:[%s624] ss:$2 sm:$0xf]
        %s626 = scalar_lea.vmem %s624, 32 [#allocation2]
        %v627 = vld [vmem:[%s626] ss:$2 sm:$0xf]
        %s628 = scalar_lea.vmem %s624, 64 [#allocation2]
        %v629 = vld [vmem:[%s628] ss:$2 sm:$0xf]
        %s630 = scalar_lea.vmem %s624, 96 [#allocation2]
        %v631 = vld [vmem:[%s630] ss:$2 sm:$0xf]
        %s632 = scalar_lea.vmem %s624, 1 [#allocation2]
        %v633 = vld [vmem:[%s632] ss:$2 sm:$0xf]
        %s634 = scalar_lea.vmem %s624, 33 [#allocation2]
        %v635 = vld [vmem:[%s634] ss:$2 sm:$0xf]
        %s636 = scalar_lea.vmem %s624, 65 [#allocation2]
        %v637 = vld [vmem:[%s636] ss:$2 sm:$0xf]
        %s638 = scalar_lea.vmem %s624, 97 [#allocation2]
        %v639 = vld [vmem:[%s638] ss:$2 sm:$0xf]
        %s640 = scalar_lea.vmem %s624, 2 [#allocation2]
        %v641 = vld [vmem:[%s640] ss:$2 sm:$0xf]
        %s642 = scalar_lea.vmem %s624, 34 [#allocation2]
        %v643 = vld [vmem:[%s642] ss:$2 sm:$0xf]
        %s644 = scalar_lea.vmem %s624, 66 [#allocation2]
        %v645 = vld [vmem:[%s644] ss:$2 sm:$0xf]
        %s646 = scalar_lea.vmem %s624, 98 [#allocation2]
        %v647 = vld [vmem:[%s646] ss:$2 sm:$0xf]
        %652 = vrot.lane.b32.xlu0 %v633, 8
        %v653 = vpop.permute.xlu0 %652
        %654 = vrot.lane.b32.xlu0 %v635, 8
        %v655 = vpop.permute.xlu0 %654
        %656 = vrot.lane.b32.xlu0 %v637, 8
        %v657 = vpop.permute.xlu0 %656
        %658 = vrot.lane.b32.xlu0 %v639, 8
        %v659 = vpop.permute.xlu0 %658
        %668 = vrot.lane.b32.xlu0 %v641, 16
        %v669 = vpop.permute.xlu0 %668
        %670 = vrot.lane.b32.xlu0 %v643, 16
        %v671 = vpop.permute.xlu0 %670
        %672 = vrot.lane.b32.xlu0 %v645, 16
        %v673 = vpop.permute.xlu0 %672
        %674 = vrot.lane.b32.xlu0 %v647, 16
        %v675 = vpop.permute.xlu0 %674
        %v680 = vsel %vm398, %v625, %v653
        %v681 = vsel %vm398, %v627, %v655
        %v682 = vsel %vm398, %v629, %v657
        %v683 = vsel %vm398, %v631, %v659
        %v684 = vsel %vm449, %v680, %v669
        %v685 = vsel %vm449, %v681, %v671
        %v686 = vsel %vm449, %v682, %v673
        %v687 = vsel %vm449, %v683, %v675
        %v688 = vld [vmem:[%s4] sm:$0xff]
        %v689 = vld [vmem:[%s4 + $0x8] sm:$0xff]
        %v690 = vld [vmem:[%s4 + $0x10] sm:$0xff]
        %s691 = sadd.s32 %s622, 1
        %s692 = smul.u32 %s691, 16
        %s693 = scalar_lea.vmem [#allocation2], %s692
        %v694 = vld [vmem:[%s693] ss:$2 sm:$0xf]
        %s695 = scalar_lea.vmem %s693, 32 [#allocation2]
        %v696 = vld [vmem:[%s695] ss:$2 sm:$0xf]
        %s697 = scalar_lea.vmem %s693, 64 [#allocation2]
        %v698 = vld [vmem:[%s697] ss:$2 sm:$0xf]
        %s699 = scalar_lea.vmem %s693, 96 [#allocation2]
        %v700 = vld [vmem:[%s699] ss:$2 sm:$0xf]
        %s701 = scalar_lea.vmem %s693, 1 [#allocation2]
        %v702 = vld [vmem:[%s701] ss:$2 sm:$0xf]
        %s703 = scalar_lea.vmem %s693, 33 [#allocation2]
        %v704 = vld [vmem:[%s703] ss:$2 sm:$0xf]
        %s705 = scalar_lea.vmem %s693, 65 [#allocation2]
        %v706 = vld [vmem:[%s705] ss:$2 sm:$0xf]
        %s707 = scalar_lea.vmem %s693, 97 [#allocation2]
        %v708 = vld [vmem:[%s707] ss:$2 sm:$0xf]
        %s709 = scalar_lea.vmem %s693, 2 [#allocation2]
        %v710 = vld [vmem:[%s709] ss:$2 sm:$0xf]
        %s711 = scalar_lea.vmem %s693, 34 [#allocation2]
        %v712 = vld [vmem:[%s711] ss:$2 sm:$0xf]
        %s713 = scalar_lea.vmem %s693, 66 [#allocation2]
        %v714 = vld [vmem:[%s713] ss:$2 sm:$0xf]
        %s715 = scalar_lea.vmem %s693, 98 [#allocation2]
        %v716 = vld [vmem:[%s715] ss:$2 sm:$0xf]
        %721 = vrot.lane.b32.xlu0 %v702, 8
        %v722 = vpop.permute.xlu0 %721
        %723 = vrot.lane.b32.xlu0 %v704, 8
        %v724 = vpop.permute.xlu0 %723
        %725 = vrot.lane.b32.xlu0 %v706, 8
        %v726 = vpop.permute.xlu0 %725
        %727 = vrot.lane.b32.xlu0 %v708, 8
        %v728 = vpop.permute.xlu0 %727
        %737 = vrot.lane.b32.xlu0 %v710, 16
        %v738 = vpop.permute.xlu0 %737
        %739 = vrot.lane.b32.xlu0 %v712, 16
        %v740 = vpop.permute.xlu0 %739
        %741 = vrot.lane.b32.xlu0 %v714, 16
        %v742 = vpop.permute.xlu0 %741
        %743 = vrot.lane.b32.xlu0 %v716, 16
        %v744 = vpop.permute.xlu0 %743
        %v749 = vsel %vm398, %v694, %v722
        %v750 = vsel %vm398, %v696, %v724
        %v751 = vsel %vm398, %v698, %v726
        %v752 = vsel %vm398, %v700, %v728
        %v753 = vsel %vm449, %v749, %v738
        %v754 = vsel %vm449, %v750, %v740
        %v755 = vsel %vm449, %v751, %v742
        %v756 = vsel %vm449, %v752, %v744
        %s757 = scalar_lea.vmem %s4, 24
        %v758 = vld [vmem:[%s757] sm:$0xff]
        %v759 = vld [vmem:[%s757 + $0x8] sm:$0xff]
        %v760 = vld [vmem:[%s757 + $0x10] sm:$0xff]
        %v765 = vcombine.low %v753, %v754
        %v766 = vcombine.low %v755, %v756
        %vm767 = vcmask 195584
        %v768 = vsel %vm767, %v765, 0
        %v770 = vsel %vm767, %v766, 0
        %772 = vmatprep.subr.mxu0 0.0
        %773 = vmatpush1.msra.mxu0 %v758
        %774 = vmatprep.subr.mxu0 0.0
        %775 = vmatpush1.msra.mxu0 %v759
        %776 = vmatprep.subr.mxu0 0.0
        %777 = vmatpush1.msra.mxu0 %v760
        %778 = vmatprep.subr.mxu0 0.0
        %779 = vmatpush1.msra.mxu0 0.0
        %780 = vmatprep.subr.mxu0 0.0
        %781 = vmatpush1.msra.mxu0 0.0
        %782 = vmatprep.subr.mxu0 0.0
        %783 = vmatpush1.msra.mxu0 0.0
        %784 = vmatprep.subr.mxu0 0.0
        %785 = vmatpush1.msra.mxu0 0.0
        %786 = vmatprep.subr.mxu0 0.0
        %787 = vmatpush1.msra.mxu0 0.0
        %788 = vmatprep.subr.mxu0 0.0
        %789 = vmatpush1.msra.mxu0 0.0
        %790 = vmatprep.subr.mxu0 0.0
        %791 = vmatpush1.msra.mxu0 0.0
        %792 = vmatprep.subr.mxu0 0.0
        %793 = vmatpush1.msra.mxu0 0.0
        %794 = vmatprep.subr.mxu0 0.0
        %795 = vmatpush1.msra.mxu0 0.0
        %796 = vmatprep.subr.mxu0 0.0
        %797 = vmatpush1.msra.mxu0 0.0
        %798 = vmatprep.subr.mxu0 0.0
        %799 = vmatpush1.msra.mxu0 0.0
        %800 = vmatprep.subr.mxu0 0.0
        %801 = vmatpush1.msra.mxu0 0.0
        %802 = vmatprep.subr.mxu0 0.0
        %803 = vmatpush1.msra.mxu0 0.0
        %804 = vmatprep.subr.mxu0 0.0
        %805 = vmatpush1.msra.mxu0 0.0
        %806 = vmatprep.subr.mxu0 0.0
        %807 = vmatpush1.msra.mxu0 0.0
        %808 = vmatprep.subr.mxu0 0.0
        %809 = vmatpush1.msra.mxu0 0.0
        %810 = vmatprep.subr.mxu0 0.0
        %811 = vmatpush1.msra.mxu0 0.0
        %812 = vmatprep.subr.mxu0 0.0
        %813 = vmatpush1.msra.mxu0 0.0
        %814 = vmatprep.subr.mxu0 0.0
        %815 = vmatpush1.msra.mxu0 0.0
        %816 = vmatprep.subr.mxu0 0.0
        %817 = vmatpush1.msra.mxu0 0.0
        %818 = vmatprep.subr.mxu0 0.0
        %819 = vmatpush1.msra.mxu0 0.0
        %820 = vmatprep.subr.mxu0 0.0
        %821 = vmatpush1.msra.mxu0 0.0
        %822 = vmatprep.subr.mxu0 0.0
        %823 = vmatpush1.msra.mxu0 0.0
        %824 = vmatprep.subr.mxu0 0.0
        %825 = vmatpush1.msra.mxu0 0.0
        %826 = vmatprep.subr.mxu0 0.0
        %827 = vmatpush1.msra.mxu0 0.0
        %828 = vmatprep.subr.mxu0 0.0
        %829 = vmatpush1.msra.mxu0 0.0
        %830 = vmatprep.subr.mxu0 0.0
        %831 = vmatpush1.msra.mxu0 0.0
        %832 = vmatprep.subr.mxu0 0.0
        %833 = vmatpush1.msra.mxu0 0.0
        %834 = vmatprep.subr.mxu0 0.0
        %835 = vmatpush1.msra.mxu0 0.0
        %836 = vmatprep.mubr.f32.mxu0 0.0
        %837 = vmatmul.mubr.f32.gmra.mrb[0].mxu0 %v768
        %v838 = vpop.f32.mrb[0].mxu0
        %v839 = vadd.f32 0.0, %v838
        %v840 = vpop.f32.mrb[0].mxu0
        %841 = vmatprep.mubr.f32.mxu0 0.0
        %842 = vmatmul.mubr.f32.gmra.mrb[0].mxu0 %v770
        %v843 = vpop.f32.mrb[0].mxu0
        %v844 = vadd.f32 0.0, %v843
        %v845 = vpop.f32.mrb[0].mxu0
        %846 = vdwg.mxu0
        %v851 = vcombine.low %v684, %v685
        %v852 = vcombine.low %v686, %v687
        %v853 = vsel %vm767, %v851, 0
        %v855 = vsel %vm767, %v852, 0
        %857 = vmatprep.subr.mxu0 0.0
        %858 = vmatpush1.msra.mxu0 %v688
        %859 = vmatprep.subr.mxu0 0.0
        %860 = vmatpush1.msra.mxu0 %v689
        %861 = vmatprep.subr.mxu0 0.0
        %862 = vmatpush1.msra.mxu0 %v690
        %863 = vmatprep.subr.mxu0 0.0
        %864 = vmatpush1.msra.mxu0 0.0
        %865 = vmatprep.subr.mxu0 0.0
        %866 = vmatpush1.msra.mxu0 0.0
        %867 = vmatprep.subr.mxu0 0.0
        %868 = vmatpush1.msra.mxu0 0.0
        %869 = vmatprep.subr.mxu0 0.0
        %870 = vmatpush1.msra.mxu0 0.0
        %871 = vmatprep.subr.mxu0 0.0
        %872 = vmatpush1.msra.mxu0 0.0
        %873 = vmatprep.subr.mxu0 0.0
        %874 = vmatpush1.msra.mxu0 0.0
        %875 = vmatprep.subr.mxu0 0.0
        %876 = vmatpush1.msra.mxu0 0.0
        %877 = vmatprep.subr.mxu0 0.0
        %878 = vmatpush1.msra.mxu0 0.0
        %879 = vmatprep.subr.mxu0 0.0
        %880 = vmatpush1.msra.mxu0 0.0
        %881 = vmatprep.subr.mxu0 0.0
        %882 = vmatpush1.msra.mxu0 0.0
        %883 = vmatprep.subr.mxu0 0.0
        %884 = vmatpush1.msra.mxu0 0.0
        %885 = vmatprep.subr.mxu0 0.0
        %886 = vmatpush1.msra.mxu0 0.0
        %887 = vmatprep.subr.mxu0 0.0
        %888 = vmatpush1.msra.mxu0 0.0
        %889 = vmatprep.subr.mxu0 0.0
        %890 = vmatpush1.msra.mxu0 0.0
        %891 = vmatprep.subr.mxu0 0.0
        %892 = vmatpush1.msra.mxu0 0.0
        %893 = vmatprep.subr.mxu0 0.0
        %894 = vmatpush1.msra.mxu0 0.0
        %895 = vmatprep.subr.mxu0 0.0
        %896 = vmatpush1.msra.mxu0 0.0
        %897 = vmatprep.subr.mxu0 0.0
        %898 = vmatpush1.msra.mxu0 0.0
        %899 = vmatprep.subr.mxu0 0.0
        %900 = vmatpush1.msra.mxu0 0.0
        %901 = vmatprep.subr.mxu0 0.0
        %902 = vmatpush1.msra.mxu0 0.0
        %903 = vmatprep.subr.mxu0 0.0
        %904 = vmatpush1.msra.mxu0 0.0
        %905 = vmatprep.subr.mxu0 0.0
        %906 = vmatpush1.msra.mxu0 0.0
        %907 = vmatprep.subr.mxu0 0.0
        %908 = vmatpush1.msra.mxu0 0.0
        %909 = vmatprep.subr.mxu0 0.0
        %910 = vmatpush1.msra.mxu0 0.0
        %911 = vmatprep.subr.mxu0 0.0
        %912 = vmatpush1.msra.mxu0 0.0
        %913 = vmatprep.subr.mxu0 0.0
        %914 = vmatpush1.msra.mxu0 0.0
        %915 = vmatprep.subr.mxu0 0.0
        %916 = vmatpush1.msra.mxu0 0.0
        %917 = vmatprep.subr.mxu0 0.0
        %918 = vmatpush1.msra.mxu0 0.0
        %919 = vmatprep.subr.mxu0 0.0
        %920 = vmatpush1.msra.mxu0 0.0
        %921 = vmatprep.mubr.f32.mxu0 0.0
        %922 = vmatmul.mubr.f32.gmra.mrb[0].mxu0 %v853
        %v923 = vpop.f32.mrb[0].mxu0
        %v924 = vadd.f32 %v839, %v923
        %v925 = vpop.f32.mrb[0].mxu0
        %926 = vmatprep.mubr.f32.mxu0 0.0
        %927 = vmatmul.mubr.f32.gmra.mrb[0].mxu0 %v855
        %v928 = vpop.f32.mrb[0].mxu0
        %v929 = vadd.f32 %v844, %v928
        %v930 = vpop.f32.mrb[0].mxu0
        %931 = vdwg.mxu0
        %s932 = sadd.s32 %s622, 2
        %s933 = smul.u32 %s932, 16
        %s934 = scalar_lea.vmem [#allocation2], %s933
        %v935 = vld [vmem:[%s934] ss:$2 sm:$0xf]
        %s936 = scalar_lea.vmem %s934, 32 [#allocation2]
        %v937 = vld [vmem:[%s936] ss:$2 sm:$0xf]
        %s938 = scalar_lea.vmem %s934, 64 [#allocation2]
        %v939 = vld [vmem:[%s938] ss:$2 sm:$0xf]
        %s940 = scalar_lea.vmem %s934, 96 [#allocation2]
        %v941 = vld [vmem:[%s940] ss:$2 sm:$0xf]
        %s942 = scalar_lea.vmem %s934, 1 [#allocation2]
        %v943 = vld [vmem:[%s942] ss:$2 sm:$0xf]
        %s944 = scalar_lea.vmem %s934, 33 [#allocation2]
        %v945 = vld [vmem:[%s944] ss:$2 sm:$0xf]
        %s946 = scalar_lea.vmem %s934, 65 [#allocation2]
        %v947 = vld [vmem:[%s946] ss:$2 sm:$0xf]
        %s948 = scalar_lea.vmem %s934, 97 [#allocation2]
        %v949 = vld [vmem:[%s948] ss:$2 sm:$0xf]
        %s950 = scalar_lea.vmem %s934, 2 [#allocation2]
        %v951 = vld [vmem:[%s950] ss:$2 sm:$0xf]
        %s952 = scalar_lea.vmem %s934, 34 [#allocation2]
        %v953 = vld [vmem:[%s952] ss:$2 sm:$0xf]
        %s954 = scalar_lea.vmem %s934, 66 [#allocation2]
        %v955 = vld [vmem:[%s954] ss:$2 sm:$0xf]
        %s956 = scalar_lea.vmem %s934, 98 [#allocation2]
        %v957 = vld [vmem:[%s956] ss:$2 sm:$0xf]
        %962 = vrot.lane.b32.xlu0 %v943, 8
        %v963 = vpop.permute.xlu0 %962
        %964 = vrot.lane.b32.xlu0 %v945, 8
        %v965 = vpop.permute.xlu0 %964
        %966 = vrot.lane.b32.xlu0 %v947, 8
        %v967 = vpop.permute.xlu0 %966
        %968 = vrot.lane.b32.xlu0 %v949, 8
        %v969 = vpop.permute.xlu0 %968
        %978 = vrot.lane.b32.xlu0 %v951, 16
        %v979 = vpop.permute.xlu0 %978
        %980 = vrot.lane.b32.xlu0 %v953, 16
        %v981 = vpop.permute.xlu0 %980
        %982 = vrot.lane.b32.xlu0 %v955, 16
        %v983 = vpop.permute.xlu0 %982
        %984 = vrot.lane.b32.xlu0 %v957, 16
        %v985 = vpop.permute.xlu0 %984
        %v990 = vsel %vm398, %v935, %v963
        %v991 = vsel %vm398, %v937, %v965
        %v992 = vsel %vm398, %v939, %v967
        %v993 = vsel %vm398, %v941, %v969
        %v994 = vsel %vm449, %v990, %v979
        %v995 = vsel %vm449, %v991, %v981
        %v996 = vsel %vm449, %v992, %v983
        %v997 = vsel %vm449, %v993, %v985
        %s998 = scalar_lea.vmem %s4, 48
        %v999 = vld [vmem:[%s998] sm:$0xff]
        %v1000 = vld [vmem:[%s998 + $0x8] sm:$0xff]
        %v1001 = vld [vmem:[%s998 + $0x10] sm:$0xff]
        %v1006 = vcombine.low %v994, %v995
        %v1007 = vcombine.low %v996, %v997
        %v1008 = vsel %vm767, %v1006, 0
        %v1010 = vsel %vm767, %v1007, 0
        %1012 = vmatprep.subr.mxu0 0.0
        %1013 = vmatpush1.msra.mxu0 %v999
        %1014 = vmatprep.subr.mxu0 0.0
        %1015 = vmatpush1.msra.mxu0 %v1000
        %1016 = vmatprep.subr.mxu0 0.0
        %1017 = vmatpush1.msra.mxu0 %v1001
        %1018 = vmatprep.subr.mxu0 0.0
        %1019 = vmatpush1.msra.mxu0 0.0
        %1020 = vmatprep.subr.mxu0 0.0
        %1021 = vmatpush1.msra.mxu0 0.0
        %1022 = vmatprep.subr.mxu0 0.0
        %1023 = vmatpush1.msra.mxu0 0.0
        %1024 = vmatprep.subr.mxu0 0.0
        %1025 = vmatpush1.msra.mxu0 0.0
        %1026 = vmatprep.subr.mxu0 0.0
        %1027 = vmatpush1.msra.mxu0 0.0
        %1028 = vmatprep.subr.mxu0 0.0
        %1029 = vmatpush1.msra.mxu0 0.0
        %1030 = vmatprep.subr.mxu0 0.0
        %1031 = vmatpush1.msra.mxu0 0.0
        %1032 = vmatprep.subr.mxu0 0.0
        %1033 = vmatpush1.msra.mxu0 0.0
        %1034 = vmatprep.subr.mxu0 0.0
        %1035 = vmatpush1.msra.mxu0 0.0
        %1036 = vmatprep.subr.mxu0 0.0
        %1037 = vmatpush1.msra.mxu0 0.0
        %1038 = vmatprep.subr.mxu0 0.0
        %1039 = vmatpush1.msra.mxu0 0.0
        %1040 = vmatprep.subr.mxu0 0.0
        %1041 = vmatpush1.msra.mxu0 0.0
        %1042 = vmatprep.subr.mxu0 0.0
        %1043 = vmatpush1.msra.mxu0 0.0
        %1044 = vmatprep.subr.mxu0 0.0
        %1045 = vmatpush1.msra.mxu0 0.0
        %1046 = vmatprep.subr.mxu0 0.0
        %1047 = vmatpush1.msra.mxu0 0.0
        %1048 = vmatprep.subr.mxu0 0.0
        %1049 = vmatpush1.msra.mxu0 0.0
        %1050 = vmatprep.subr.mxu0 0.0
        %1051 = vmatpush1.msra.mxu0 0.0
        %1052 = vmatprep.subr.mxu0 0.0
        %1053 = vmatpush1.msra.mxu0 0.0
        %1054 = vmatprep.subr.mxu0 0.0
        %1055 = vmatpush1.msra.mxu0 0.0
        %1056 = vmatprep.subr.mxu0 0.0
        %1057 = vmatpush1.msra.mxu0 0.0
        %1058 = vmatprep.subr.mxu0 0.0
        %1059 = vmatpush1.msra.mxu0 0.0
        %1060 = vmatprep.subr.mxu0 0.0
        %1061 = vmatpush1.msra.mxu0 0.0
        %1062 = vmatprep.subr.mxu0 0.0
        %1063 = vmatpush1.msra.mxu0 0.0
        %1064 = vmatprep.subr.mxu0 0.0
        %1065 = vmatpush1.msra.mxu0 0.0
        %1066 = vmatprep.subr.mxu0 0.0
        %1067 = vmatpush1.msra.mxu0 0.0
        %1068 = vmatprep.subr.mxu0 0.0
        %1069 = vmatpush1.msra.mxu0 0.0
        %1070 = vmatprep.subr.mxu0 0.0
        %1071 = vmatpush1.msra.mxu0 0.0
        %1072 = vmatprep.subr.mxu0 0.0
        %1073 = vmatpush1.msra.mxu0 0.0
        %1074 = vmatprep.subr.mxu0 0.0
        %1075 = vmatpush1.msra.mxu0 0.0
        %1076 = vmatprep.mubr.f32.mxu0 0.0
        %1077 = vmatmul.mubr.f32.gmra.mrb[0].mxu0 %v1008
        %v1078 = vpop.f32.mrb[0].mxu0
        %v1079 = vadd.f32 0.0, %v1078
        %v1080 = vpop.f32.mrb[0].mxu0
        %1081 = vmatprep.mubr.f32.mxu0 0.0
        %1082 = vmatmul.mubr.f32.gmra.mrb[0].mxu0 %v1010
        %v1083 = vpop.f32.mrb[0].mxu0
        %v1084 = vadd.f32 0.0, %v1083
        %v1085 = vpop.f32.mrb[0].mxu0
        %1086 = vdwg.mxu0
        %v1087 = vadd.f32 %v924, %v1079
        %v1088 = vadd.f32 %v929, %v1084
        %v1089 = vlaneseq
        %v1090 = vshrl.u32 %v1089, 7
        %v1091 = vsub.s32 0, %v1090
        %v1092 = vrot.slane %v428, %v1091
        %v1093 = vmul.f32 %v1087, %v1092
        %v1094 = vmul.f32 %v1088, %v1092
        %v1095 = vlaneseq
        %v1096 = vshrl.u32 %v1095, 7
        %v1097 = vsub.s32 0, %v1096
        %v1098 = vrot.slane %v429, %v1097
        %v1099 = vadd.f32 %v1093, %v1098
        %v1100 = vadd.f32 %v1094, %v1098
        %v1101 = vmax.f32 %v1099, 0.0
        %v1102 = vmax.f32 %v1100, 0.0
        %v1104 = vsel %vm398, %v1101, 0
        %v1107 = vsel %vm398, %v1102, 0
        %1109 = vmatprep.subr.mxu0 0.0
        %1110 = vmatpush1.msra.mxu0 %v436
        %1111 = vmatprep.subr.mxu0 0.0
        %1112 = vmatpush1.msra.mxu0 0.0
        %1113 = vmatprep.subr.mxu0 0.0
        %1114 = vmatpush1.msra.mxu0 0.0
        %1115 = vmatprep.subr.mxu0 0.0
        %1116 = vmatpush1.msra.mxu0 0.0
        %1117 = vmatprep.subr.mxu0 0.0
        %1118 = vmatpush1.msra.mxu0 0.0
        %1119 = vmatprep.subr.mxu0 0.0
        %1120 = vmatpush1.msra.mxu0 0.0
        %1121 = vmatprep.subr.mxu0 0.0
        %1122 = vmatpush1.msra.mxu0 0.0
        %1123 = vmatprep.subr.mxu0 0.0
        %1124 = vmatpush1.msra.mxu0 0.0
        %1125 = vmatprep.subr.mxu0 0.0
        %1126 = vmatpush1.msra.mxu0 0.0
        %1127 = vmatprep.subr.mxu0 0.0
        %1128 = vmatpush1.msra.mxu0 0.0
        %1129 = vmatprep.subr.mxu0 0.0
        %1130 = vmatpush1.msra.mxu0 0.0
        %1131 = vmatprep.subr.mxu0 0.0
        %1132 = vmatpush1.msra.mxu0 0.0
        %1133 = vmatprep.subr.mxu0 0.0
        %1134 = vmatpush1.msra.mxu0 0.0
        %1135 = vmatprep.subr.mxu0 0.0
        %1136 = vmatpush1.msra.mxu0 0.0
        %1137 = vmatprep.subr.mxu0 0.0
        %1138 = vmatpush1.msra.mxu0 0.0
        %1139 = vmatprep.subr.mxu0 0.0
        %1140 = vmatpush1.msra.mxu0 0.0
        %1141 = vmatprep.subr.mxu0 0.0
        %1142 = vmatpush1.msra.mxu0 0.0
        %1143 = vmatprep.subr.mxu0 0.0
        %1144 = vmatpush1.msra.mxu0 0.0
        %1145 = vmatprep.subr.mxu0 0.0
        %1146 = vmatpush1.msra.mxu0 0.0
        %1147 = vmatprep.subr.mxu0 0.0
        %1148 = vmatpush1.msra.mxu0 0.0
        %1149 = vmatprep.subr.mxu0 0.0
        %1150 = vmatpush1.msra.mxu0 0.0
        %1151 = vmatprep.subr.mxu0 0.0
        %1152 = vmatpush1.msra.mxu0 0.0
        %1153 = vmatprep.subr.mxu0 0.0
        %1154 = vmatpush1.msra.mxu0 0.0
        %1155 = vmatprep.subr.mxu0 0.0
        %1156 = vmatpush1.msra.mxu0 0.0
        %1157 = vmatprep.subr.mxu0 0.0
        %1158 = vmatpush1.msra.mxu0 0.0
        %1159 = vmatprep.subr.mxu0 0.0
        %1160 = vmatpush1.msra.mxu0 0.0
        %1161 = vmatprep.subr.mxu0 0.0
        %1162 = vmatpush1.msra.mxu0 0.0
        %1163 = vmatprep.subr.mxu0 0.0
        %1164 = vmatpush1.msra.mxu0 0.0
        %1165 = vmatprep.subr.mxu0 0.0
        %1166 = vmatpush1.msra.mxu0 0.0
        %1167 = vmatprep.subr.mxu0 0.0
        %1168 = vmatpush1.msra.mxu0 0.0
        %1169 = vmatprep.subr.mxu0 0.0
        %1170 = vmatpush1.msra.mxu0 0.0
        %1171 = vmatprep.subr.mxu0 0.0
        %1172 = vmatpush1.msra.mxu0 0.0
        %1173 = vmatprep.mubr.f32.mxu0 0.0
        %1174 = vmatmul.mubr.f32.gmra.mrb[0].mxu0 %v1104
        %v1175 = vpop.f32.mrb[0].mxu0
        %v1176 = vadd.f32 0.0, %v1175
        %v1177 = vpop.f32.mrb[0].mxu0
        %1178 = vmatprep.mubr.f32.mxu0 0.0
        %1179 = vmatmul.mubr.f32.gmra.mrb[0].mxu0 %v1107
        %v1180 = vpop.f32.mrb[0].mxu0
        %v1181 = vadd.f32 0.0, %v1180
        %v1182 = vpop.f32.mrb[0].mxu0
        %1183 = vdwg.mxu0
        %v1184 = vlaneseq
        %v1185 = vshrl.u32 %v1184, 7
        %v1186 = vsub.s32 0, %v1185
        %v1187 = vrot.slane %v430, %v1186
        %v1188 = vmul.f32 %v1176, %v1187
        %v1189 = vmul.f32 %v1181, %v1187
        %v1190 = vlaneseq
        %v1191 = vshrl.u32 %v1190, 7
        %v1192 = vsub.s32 0, %v1191
        %v1193 = vrot.slane %v431, %v1192
        %v1194 = vadd.f32 %v1188, %v1193
        %v1195 = vadd.f32 %v1189, %v1193
        %s1196 = smul.u32 0, 4
        %s1197 = scalar_lea.vmem %s397, %s1196
        %v1198 = vld [vmem:[%s1197] sm:$0xf]
        %v1199 = vld [vmem:[%s1197 + $0x4] sm:$0xf]
        %v1200 = vld [vmem:[%s1197 + $0x8] sm:$0xf]
        %v1201 = vld [vmem:[%s1197 + $0xc] sm:$0xf]
        %v1206 = vcombine.low %v1198, %v1199
        %v1207 = vcombine.low %v1200, %v1201
        %v1208 = vsel %vm449, %v1206, 0
        %v1210 = vsel %vm449, %v1207, 0
        %1212 = vmatprep.subr.mxu0 0.0
        %1213 = vmatpush1.msra.mxu0 %v437
        %1214 = vmatprep.subr.mxu0 0.0
        %1215 = vmatpush1.msra.mxu0 %v438
        %1216 = vmatprep.subr.mxu0 0.0
        %1217 = vmatpush1.msra.mxu0 0.0
        %1218 = vmatprep.subr.mxu0 0.0
        %1219 = vmatpush1.msra.mxu0 0.0
        %1220 = vmatprep.subr.mxu0 0.0
        %1221 = vmatpush1.msra.mxu0 0.0
        %1222 = vmatprep.subr.mxu0 0.0
        %1223 = vmatpush1.msra.mxu0 0.0
        %1224 = vmatprep.subr.mxu0 0.0
        %1225 = vmatpush1.msra.mxu0 0.0
        %1226 = vmatprep.subr.mxu0 0.0
        %1227 = vmatpush1.msra.mxu0 0.0
        %1228 = vmatprep.subr.mxu0 0.0
        %1229 = vmatpush1.msra.mxu0 0.0
        %1230 = vmatprep.subr.mxu0 0.0
        %1231 = vmatpush1.msra.mxu0 0.0
        %1232 = vmatprep.subr.mxu0 0.0
        %1233 = vmatpush1.msra.mxu0 0.0
        %1234 = vmatprep.subr.mxu0 0.0
        %1235 = vmatpush1.msra.mxu0 0.0
        %1236 = vmatprep.subr.mxu0 0.0
        %1237 = vmatpush1.msra.mxu0 0.0
        %1238 = vmatprep.subr.mxu0 0.0
        %1239 = vmatpush1.msra.mxu0 0.0
        %1240 = vmatprep.subr.mxu0 0.0
        %1241 = vmatpush1.msra.mxu0 0.0
        %1242 = vmatprep.subr.mxu0 0.0
        %1243 = vmatpush1.msra.mxu0 0.0
        %1244 = vmatprep.subr.mxu0 0.0
        %1245 = vmatpush1.msra.mxu0 0.0
        %1246 = vmatprep.subr.mxu0 0.0
        %1247 = vmatpush1.msra.mxu0 0.0
        %1248 = vmatprep.subr.mxu0 0.0
        %1249 = vmatpush1.msra.mxu0 0.0
        %1250 = vmatprep.subr.mxu0 0.0
        %1251 = vmatpush1.msra.mxu0 0.0
        %1252 = vmatprep.subr.mxu0 0.0
        %1253 = vmatpush1.msra.mxu0 0.0
        %1254 = vmatprep.subr.mxu0 0.0
        %1255 = vmatpush1.msra.mxu0 0.0
        %1256 = vmatprep.subr.mxu0 0.0
        %1257 = vmatpush1.msra.mxu0 0.0
        %1258 = vmatprep.subr.mxu0 0.0
        %1259 = vmatpush1.msra.mxu0 0.0
        %1260 = vmatprep.subr.mxu0 0.0
        %1261 = vmatpush1.msra.mxu0 0.0
        %1262 = vmatprep.subr.mxu0 0.0
        %1263 = vmatpush1.msra.mxu0 0.0
        %1264 = vmatprep.subr.mxu0 0.0
        %1265 = vmatpush1.msra.mxu0 0.0
        %1266 = vmatprep.subr.mxu0 0.0
        %1267 = vmatpush1.msra.mxu0 0.0
        %1268 = vmatprep.subr.mxu0 0.0
        %1269 = vmatpush1.msra.mxu0 0.0
        %1270 = vmatprep.subr.mxu0 0.0
        %1271 = vmatpush1.msra.mxu0 0.0
        %1272 = vmatprep.subr.mxu0 0.0
        %1273 = vmatpush1.msra.mxu0 0.0
        %1274 = vmatprep.subr.mxu0 0.0
        %1275 = vmatpush1.msra.mxu0 0.0
        %1276 = vmatprep.mubr.f32.mxu0 0.0
        %1277 = vmatmul.mubr.f32.gmra.mrb[0].mxu0 %v1208
        %v1278 = vpop.f32.mrb[0].mxu0
        %v1279 = vadd.f32 0.0, %v1278
        %v1280 = vpop.f32.mrb[0].mxu0
        %1281 = vmatprep.mubr.f32.mxu0 0.0
        %1282 = vmatmul.mubr.f32.gmra.mrb[0].mxu0 %v1210
        %v1283 = vpop.f32.mrb[0].mxu0
        %v1284 = vadd.f32 0.0, %v1283
        %v1285 = vpop.f32.mrb[0].mxu0
        %1286 = vdwg.mxu0
        %v1287 = vlaneseq
        %v1288 = vshrl.u32 %v1287, 7
        %v1289 = vsub.s32 0, %v1288
        %v1290 = vrot.slane %v432, %v1289
        %v1291 = vmul.f32 %v1279, %v1290
        %v1292 = vmul.f32 %v1284, %v1290
        %v1293 = vlaneseq
        %v1294 = vshrl.u32 %v1293, 7
        %v1295 = vsub.s32 0, %v1294
        %v1296 = vrot.slane %v433, %v1295
        %v1297 = vadd.f32 %v1291, %v1296
        %v1298 = vadd.f32 %v1292, %v1296
        %v1299 = vadd.f32 %v1194, %v1297
        %v1300 = vadd.f32 %v1195, %v1298
        %v1301 = vmax.f32 %v1299, 0.0
        %v1302 = vmax.f32 %v1300, 0.0
        %v1305 = vcombine.high %v1301, %v1301
        %v1306 = vcombine.high %v1302, %v1302
        %s1309 = scalar_lea.vmem %s392, %s1196 [#allocation6]
        %vm1310 = vcmask 257024
        %1311 = vst.msk [vmem:[%s1309] sm:$0xf] %vm1310, %v1301
        %1312 = vst.msk [vmem:[%s1309 + $0x4] sm:$0xf] %vm1310, %v1305
        %1313 = vst.msk [vmem:[%s1309 + $0x8] sm:$0xf] %vm1310, %v1302
        %1314 = vst.msk [vmem:[%s1309 + $0xc] sm:$0xf] %vm1310, %v1306
        %s1315 = sand.u32 %s255, 1
        %s1316 = scalar_lea.sflag [#allocation5], %s1315
        %s1317 = sand.u32 %s255, 1
        %s1318 = smul.addr %s1317, 16
        %s1319 = scalar_lea.vmem [#allocation6], %s1318
        // Predicated region
        $region65: #{tpu_custom_call.1} parent=59 // pred_check
          %p1320 = pneg %p265
        $region66: #{tpu_custom_call.1} parent=59 // pred_check_branch
          %1322 = sbr.rel (%p1320) target = $region68
        $region67: #{tpu_custom_call.1} parent=59 // pred_region
          %s1324 = ssub.s32 256, 256
          %1325 = vsyncadd %s1316, %s1324
          %s1326 = smul.addr %s27, 4
          %s1327 = smul.addr %s1326, 64
          %s1328 = scalar_lea.hbm %s10, %s1327
          %s1329 = sshll.u32 %s1319, 4
          %s1330 = int_to_ptr.vmem [resolvable:$true] %s1329
          %1335 = dma.vmem_to_hbm [thread:$0]  %s1330, 256, %s1328, %s1316, 64, 64, 4
        $region68: #{tpu_custom_call.1} parent=59 // pred_fallthru
          _
      $region60: #{tpu_custom_call.1} parent=5 // pred_fallthru
        _
      %p1336 = scmp.le.s32.totalorder 2, %s22
      // Predicated region
      $region69: #{tpu_custom_call.1} parent=5 // pred_check
        %p1337 = pneg %p1336
      $region70: #{tpu_custom_call.1} parent=5 // pred_check_branch
        %1339 = sbr.rel (%p1337) target = $region72
      $region71: #{tpu_custom_call.1} parent=5 // pred_region
        %s1340 = ssub.s32 %s22, 2
        // Predicated region
        $region73: #{tpu_custom_call.1} parent=71 // pred_check
          %p1341 = pneg %p271
        $region74: #{tpu_custom_call.1} parent=71 // pred_check_branch
          %1343 = sbr.rel (%p1341) target = $region76
        $region75: #{tpu_custom_call.1} parent=71 // pred_region
          %s1344 = sand.u32 %s256, 1
          %s1345 = scalar_lea.sflag [#allocation5], %s1344
          %s1346 = sand.u32 %s256, 1
          %s1347 = smul.addr %s1346, 16
          %s1348 = scalar_lea.vmem [#allocation6], %s1347
          %1349 = dma.done %s1345, 256
        $region76: #{tpu_custom_call.1} parent=71 // pred_fallthru
          _
      $region72: #{tpu_custom_call.1} parent=5 // pred_fallthru
        _
    $region6: #{tpu_custom_call.1} parent=1 // loop_footer
      %s26 = sadd.s32 1, %s22
    $region7: #{tpu_custom_call.1} parent=1 // loop_footer_branch
      %21 = sbr.rel target = $region3
    $region8: #{tpu_custom_call.1} parent=1 // loop_exit
      _
    %1350 = vsyncpa [#allocation4], 1
    %s1351 = scalar_lea.sflag [#allocation4], 1
    %1352 = vsyncpa %s1351, 1
    %1353 = vsyncpa [#allocation5], 1
    %s1354 = scalar_lea.sflag [#allocation5], 1
    %1355 = vsyncpa %s1354, 1

</llo_original>
